<compile_context>
chip_gen: v5e
topology: v5e:2x2
jax: 0.10.0
libtpu: 0.0.40
codegen_flags: <defaults>
</compile_context>

<pallas_src>
import jax
import jax.numpy as jnp
from jax.experimental import pallas as pl
from jax.experimental.pallas import tpu as pltpu  # noqa: F401  (TPU backend)

# ---------------- static config (synthetic, consistent with __init__) ----------------
T, N = 8, 2            # sequence length, batch
COND = 4               # obs_sections.condition
NLINES = 6             # obs_spaces.lines.shape[0]
NT = 5                 # obs_spaces.lines.nvec[0]  (task vocabulary)
HID = 32               # hidden_size
NA = 8                 # n_a = action_space.nvec[0]
ACTION_SIZE = 2
STATE_SIZE = 1 + 1 + HID + NA   # RecurrentState: a(1), v(1), h(HID), a_probs(NA)

FP32 = jnp.float32
G3 = 3 * HID                    # 96: r|z|n gates along lanes

# weight-slab column offsets (each matrix starts on a 128-lane tile boundary)
C_WI_F, C_WI_B = 0, 128         # encoder input gates, fwd / bwd
C_WH_F, C_WH_B, C_WH_C = 256, 384, 512   # per-step hidden gates (fwd / bwd / cell)
C_W1, C_W2, C_WAC = 640, 768, 896        # mlp1, mlp2, actor|critic
W32_COLS = 1024

# bias-slab rows
R_GI_F, R_GI_B, R_BHN_F, R_BHN_B = 0, 1, 2, 3
R_GI_C, R_BHN_C, R_B1, R_B2, R_BAC = 4, 5, 6, 7, 8
BIAS_ROWS = 16

OUT_W = HID + NA + 1            # output slab columns: [h(32) | logits(8) | v(1)]


def _mm(a, b):
    return jnp.dot(a, b, preferred_element_type=jnp.float32)


# ---------------- single fused kernel ----------------
def fused_recurrence_kernel(m_ref, cond_ref, h0_ref, w_ref, wg_ref, b_ref, out_ref):
    L, Hd, G = NLINES, HID, G3

    # ---- loop-invariant loads (hoisted off both serial chains) ----------------
    wh_f = w_ref[:, C_WH_F:C_WH_F + G]              # (32, 96)
    wh_b = w_ref[:, C_WH_B:C_WH_B + G]
    wh_c = w_ref[:, C_WH_C:C_WH_C + G]
    bhn_f = b_ref[R_BHN_F:R_BHN_F + 1, 0:Hd]        # (1, 32) -- b_hn stays per-step
    bhn_b = b_ref[R_BHN_B:R_BHN_B + 1, 0:Hd]
    bhn_c = b_ref[R_BHN_C:R_BHN_C + 1, 0:Hd]

    def gru_step(gi, gh, bhn, h):
        # gi: hoisted W_i x + b_i (+ b_hr|b_hz folded), gh: h @ W_h, lanes r|z|n
        rz = jax.nn.sigmoid(gi[:, 0:2 * Hd] + gh[:, 0:2 * Hd])        # one sigmoid
        n = jnp.tanh(gi[:, 2 * Hd:G] + rz[:, 0:Hd] * (gh[:, 2 * Hd:G] + bhn))
        return n + rz[:, Hd:2 * Hd] * (h - n)                          # (1-z)n + z h

    # ---- stage 1: bidirectional GRU task encoder -------------------------------
    m2 = m_ref[...]                                                    # (L*N, 32)
    gi_f = _mm(m2, w_ref[:, C_WI_F:C_WI_F + G]) + b_ref[R_GI_F:R_GI_F + 1, 0:G]
    gi_b = _mm(m2, w_ref[:, C_WI_B:C_WI_B + G]) + b_ref[R_GI_B:R_GI_B + 1, 0:G]

    hf = jnp.zeros((N, Hd), FP32)
    hb = jnp.zeros((N, Hd), FP32)
    # forward / backward chains interleaved, fully unrolled; one 96-wide MXU
    # push per chain per step is all that remains on each serial chain.
    for l in range(L):
        lb = L - 1 - l
        gh_f = _mm(hf, wh_f)
        gh_b = _mm(hb, wh_b)
        hf = gru_step(gi_f[l * N:(l + 1) * N], gh_f, bhn_f, hf)
        hb = gru_step(gi_b[lb * N:(lb + 1) * N], gh_b, bhn_b, hb)
    # hf / hb are the bidirectional final hiddens; concat == task encoding H.

    # ---- stage 2: GRUCell recurrence over time ---------------------------------
    hcat = jnp.concatenate([hf, hb], axis=1)                           # (N, 64)
    gx = _mm(cond_ref[...], wg_ref[0:8, :])                            # (T*N, 96)
    ge = _mm(hcat, wg_ref[8:8 + 2 * Hd, :]) + b_ref[R_GI_C:R_GI_C + 1, 0:G]  # (N, 96)

    h = h0_ref[...]
    for t in range(T):
        gi = gx[t * N:(t + 1) * N] + ge                # h-independent, off-chain
        gh = _mm(h, wh_c)
        h = gru_step(gi, gh, bhn_c, h)
        out_ref[t * N:(t + 1) * N, 0:Hd] = h           # store into (T*N, .) layout

    # ---- stage 3: heads, batched over all (T*N) rows ----------------------------
    hs = out_ref[:, 0:Hd]                                              # (T*N, 32)
    z1 = jnp.maximum(_mm(hs, w_ref[:, C_W1:C_W1 + Hd]) + b_ref[R_B1:R_B1 + 1, 0:Hd], 0.0)
    z2 = jnp.maximum(_mm(z1, w_ref[:, C_W2:C_W2 + Hd]) + b_ref[R_B2:R_B2 + 1, 0:Hd], 0.0)
    # outer F.relu of the reference is idempotent after the mlp's final ReLU.
    av = _mm(z2, w_ref[:, C_WAC:C_WAC + NA + 1]) + b_ref[R_BAC:R_BAC + 1, 0:NA + 1]
    out_ref[:, Hd:Hd + NA + 1] = av                    # [logits | v] into the slab


def fused_recurrence(m2, cond2p, h0, packed):
    return pl.pallas_call(
        fused_recurrence_kernel,
        out_shape=jax.ShapeDtypeStruct((T * N, OUT_W), FP32),
    )(m2, cond2p, h0, packed['w32'], packed['w_gru_in'], packed['bias'])


# ---------------- deterministic parameter init + packing ----------------
def init_params(seed=0):
    keys = iter(jax.random.split(jax.random.PRNGKey(seed), 32))

    def w(shape, s=0.1):
        return (s * jax.random.normal(next(keys), shape)).astype(FP32)

    return dict(
        embed_task=w((NT, HID)),
        # bidirectional GRU (task_encoder): per-gate stacked [r, z, n]
        enc_wi_f=w((3, HID, HID)), enc_wh_f=w((3, HID, HID)),
        enc_bi_f=w((3, 1, HID)), enc_bh_f=w((3, 1, HID)),
        enc_wi_b=w((3, HID, HID)), enc_wh_b=w((3, HID, HID)),
        enc_bi_b=w((3, 1, HID)), enc_bh_b=w((3, 1, HID)),
        # GRUCell: Wi split between condition / fwd-encoder / bwd-encoder parts
        gru_wi_cond=w((3, COND, HID)),
        gru_wi_hf=w((3, HID, HID)), gru_wi_hb=w((3, HID, HID)),
        gru_wh=w((3, HID, HID)), gru_bi=w((3, 1, HID)), gru_bh=w((3, 1, HID)),
        mlp_w1=w((HID, HID)), mlp_b1=w((1, HID)),
        mlp_w2=w((HID, HID)), mlp_b2=w((1, HID)),
        actor_w=w((HID, NA)), actor_b=w((1, NA)),
        critic_w=w((HID, 1)), critic_b=w((1, 1)),
    )


def _gates_cols(w):   # (3, in, out) -> (in, 3*out), columns ordered r|z|n
    return jnp.transpose(w, (1, 0, 2)).reshape(w.shape[1], -1)


def _gates_row(b):    # (3, 1, out) -> (1, 3*out)
    return b.reshape(1, -1)


def pack_params(p):
    """Pack all weights/biases into 3 lane-dense slabs (runs once, outside the kernel)."""
    w32 = jnp.zeros((HID, W32_COLS), FP32)
    w32 = w32.at[:, C_WI_F:C_WI_F + G3].set(_gates_cols(p['enc_wi_f']))
    w32 = w32.at[:, C_WI_B:C_WI_B + G3].set(_gates_cols(p['enc_wi_b']))
    w32 = w32.at[:, C_WH_F:C_WH_F + G3].set(_gates_cols(p['enc_wh_f']))
    w32 = w32.at[:, C_WH_B:C_WH_B + G3].set(_gates_cols(p['enc_wh_b']))
    w32 = w32.at[:, C_WH_C:C_WH_C + G3].set(_gates_cols(p['gru_wh']))
    w32 = w32.at[:, C_W1:C_W1 + HID].set(p['mlp_w1'])
    w32 = w32.at[:, C_W2:C_W2 + HID].set(p['mlp_w2'])
    w32 = w32.at[:, C_WAC:C_WAC + NA].set(p['actor_w'])
    w32 = w32.at[:, C_WAC + NA:C_WAC + NA + 1].set(p['critic_w'])

    # GRUCell W_ih: rows 0:4 condition part (rows 4:8 zero pad), rows 8:72 [hf|hb] part
    w_gru_in = jnp.zeros((8 + 2 * HID, G3), FP32)
    w_gru_in = w_gru_in.at[0:COND, :].set(_gates_cols(p['gru_wi_cond']))
    w_gru_in = w_gru_in.at[8:8 + HID, :].set(_gates_cols(p['gru_wi_hf']))
    w_gru_in = w_gru_in.at[8 + HID:8 + 2 * HID, :].set(_gates_cols(p['gru_wi_hb']))

    def hoist_bias(bi, bh):
        # fold b_hr, b_hz into the hoisted input-gate bias; b_hn must NOT be
        # folded (it stays inside r * (W_hn h + b_hn)).
        v = _gates_row(bi)
        return v.at[:, 0:2 * HID].add(_gates_row(bh)[:, 0:2 * HID])

    bias = jnp.zeros((BIAS_ROWS, 128), FP32)
    bias = bias.at[R_GI_F:R_GI_F + 1, 0:G3].set(hoist_bias(p['enc_bi_f'], p['enc_bh_f']))
    bias = bias.at[R_GI_B:R_GI_B + 1, 0:G3].set(hoist_bias(p['enc_bi_b'], p['enc_bh_b']))
    bias = bias.at[R_BHN_F:R_BHN_F + 1, 0:HID].set(p['enc_bh_f'][2])
    bias = bias.at[R_BHN_B:R_BHN_B + 1, 0:HID].set(p['enc_bh_b'][2])
    bias = bias.at[R_GI_C:R_GI_C + 1, 0:G3].set(hoist_bias(p['gru_bi'], p['gru_bh']))
    bias = bias.at[R_BHN_C:R_BHN_C + 1, 0:HID].set(p['gru_bh'][2])
    bias = bias.at[R_B1:R_B1 + 1, 0:HID].set(p['mlp_b1'])
    bias = bias.at[R_B2:R_B2 + 1, 0:HID].set(p['mlp_b2'])
    bias = bias.at[R_BAC:R_BAC + 1, 0:NA].set(p['actor_b'])
    bias = bias.at[R_BAC:R_BAC + 1, NA:NA + 1].set(p['critic_b'])

    return dict(embed_task=p['embed_task'], w32=w32, w_gru_in=w_gru_in, bias=bias)


# ---------------- forward (pack(inner_loop(...))) ----------------
def recurrence_forward(inputs, rnn_hxs, packed, sample_key):
    Tt, Nn, D = inputs.shape
    obs = inputs[..., : D - ACTION_SIZE]
    actions = inputs[..., D - ACTION_SIZE:]
    condition = obs[..., :COND].astype(FP32)                          # (T, N, COND)
    lines0 = obs[0, :, COND:COND + NLINES].astype(jnp.int32)          # (N, NLINES)

    # embed_task (gather stays in XLA) -> pre-flattened (L*N, H) for the kernel
    M = jnp.take(packed['embed_task'], lines0, axis=0)                # (N, L, H)
    m2 = jnp.transpose(M, (1, 0, 2)).reshape(NLINES * Nn, HID).astype(FP32)

    # pre-flattened, zero-padded condition: (T*N, 8) (pad cols meet zero weight rows)
    cond2p = jnp.pad(condition.reshape(Tt * Nn, COND), ((0, 0), (0, 8 - COND)))

    # parse_hidden: fields a(1), v(1), h(HID), a_probs(NA)
    h0 = rnn_hxs[0][:, 2:2 + HID].astype(FP32)                        # (N, HID)

    out = fused_recurrence(m2, cond2p, h0, packed)                    # (T*N, 41)
    out = out.reshape(Tt, Nn, OUT_W)
    h_seq = out[..., :HID]                                            # (T, N, HID)
    logits = out[..., HID:HID + NA]                                   # (T, N, NA)
    v_seq = out[..., HID + NA:HID + NA + 1]                           # (T, N, 1)

    # exact actor distribution: probs = softmax(logits); sample from logits.
    # (the appended previous-action row of A in the reference is never read by
    #  the loop, so only actions[:, :, 0] gates the sampling.)
    p_seq = jax.nn.softmax(logits, axis=-1)
    sampled = jax.random.categorical(sample_key, logits, axis=-1)
    A = actions[:, :, 0].astype(jnp.int32)                            # (T, N)
    a_seq = jnp.where(A < 0, sampled, A).astype(FP32)[..., None]      # (T, N, 1)

    # pack: concat [a, v, h, a_probs] along last dim -> (T, N, STATE_SIZE)
    hx = jnp.concatenate([a_seq, v_seq, h_seq, p_seq], axis=-1)
    return hx, hx[-1:]


if __name__ == "__main__":
    key = jax.random.PRNGKey(0)
    k_cond, k_lines, k_act, k_hx, k_sample = jax.random.split(key, 5)

    cond_in = jax.random.normal(k_cond, (T, N, COND), FP32)
    lines_in = jnp.broadcast_to(
        jax.random.randint(k_lines, (1, N, NLINES), 0, NT).astype(FP32),
        (T, N, NLINES))
    act_in = jax.random.randint(k_act, (T, N, ACTION_SIZE), -1, NA).astype(FP32)
    inputs = jnp.concatenate([cond_in, lines_in, act_in], axis=-1)    # (T, N, 12)
    rnn_hxs = 0.1 * jax.random.normal(k_hx, (1, N, STATE_SIZE), FP32)

    packed = pack_params(init_params(0))
    hx, last = jax.jit(recurrence_forward)(inputs, rnn_hxs, packed, k_sample)
    jax.block_until_ready((hx, last))
    assert hx.shape == (T, N, STATE_SIZE) and last.shape == (1, N, STATE_SIZE)
    print("KERNEL_OK")
</pallas_src>

<mosaic_0001>
module attributes {stable_mosaic.version = 11 : i64} {
  func.func @fused_recurrence_kernel(%arg0: memref<12x32xf32, #tpu.memory_space<vmem>>, %arg1: memref<16x8xf32, #tpu.memory_space<vmem>>, %arg2: memref<2x32xf32, #tpu.memory_space<vmem>>, %arg3: memref<32x1024xf32, #tpu.memory_space<vmem>>, %arg4: memref<72x96xf32, #tpu.memory_space<vmem>>, %arg5: memref<16x128xf32, #tpu.memory_space<vmem>>, %arg6: memref<16x41xf32, #tpu.memory_space<vmem>>) attributes {dimension_semantics = [], scalar_prefetch = 0 : i64, scratch_operands = 0 : i64, tpu.core_type = #tpu.core_type<tc>} {
    %c0 = arith.constant 0 : index
    %c256 = arith.constant 256 : index
    %0 = vector.load %arg3[%c0, %c256] : memref<32x1024xf32, #tpu.memory_space<vmem>>, vector<32x96xf32>
    %c0_0 = arith.constant 0 : index
    %c384 = arith.constant 384 : index
    %1 = vector.load %arg3[%c0_0, %c384] : memref<32x1024xf32, #tpu.memory_space<vmem>>, vector<32x96xf32>
    %c0_1 = arith.constant 0 : index
    %c512 = arith.constant 512 : index
    %2 = vector.load %arg3[%c0_1, %c512] : memref<32x1024xf32, #tpu.memory_space<vmem>>, vector<32x96xf32>
    %c2 = arith.constant 2 : index
    %c0_2 = arith.constant 0 : index
    %3 = vector.load %arg5[%c2, %c0_2] : memref<16x128xf32, #tpu.memory_space<vmem>>, vector<1x32xf32>
    %c3 = arith.constant 3 : index
    %c0_3 = arith.constant 0 : index
    %4 = vector.load %arg5[%c3, %c0_3] : memref<16x128xf32, #tpu.memory_space<vmem>>, vector<1x32xf32>
    %c5 = arith.constant 5 : index
    %c0_4 = arith.constant 0 : index
    %5 = vector.load %arg5[%c5, %c0_4] : memref<16x128xf32, #tpu.memory_space<vmem>>, vector<1x32xf32>
    %c0_5 = arith.constant 0 : index
    %c0_6 = arith.constant 0 : index
    %6 = vector.load %arg0[%c0_5, %c0_6] : memref<12x32xf32, #tpu.memory_space<vmem>>, vector<12x32xf32>
    %c0_7 = arith.constant 0 : index
    %c0_8 = arith.constant 0 : index
    %7 = vector.load %arg3[%c0_7, %c0_8] : memref<32x1024xf32, #tpu.memory_space<vmem>>, vector<32x96xf32>
    %cst = arith.constant dense<0.000000e+00> : vector<12x96xf32>
    %8 = tpu.matmul %6, %7, %cst {dimension_numbers = #tpu.dot_dimension_numbers<[1], [0], [0], [1], [0, 0, 1, 1], [], []>} : vector<12x32xf32>, vector<32x96xf32>, vector<12x96xf32> -> vector<12x96xf32>
    %c0_9 = arith.constant 0 : index
    %c0_10 = arith.constant 0 : index
    %9 = vector.load %arg5[%c0_9, %c0_10] : memref<16x128xf32, #tpu.memory_space<vmem>>, vector<1x96xf32>
    %10 = vector.broadcast %9 : vector<1x96xf32> to vector<12x96xf32>
    %11 = arith.addf %8, %10 : vector<12x96xf32>
    %c0_11 = arith.constant 0 : index
    %c128 = arith.constant 128 : index
    %12 = vector.load %arg3[%c0_11, %c128] : memref<32x1024xf32, #tpu.memory_space<vmem>>, vector<32x96xf32>
    %cst_12 = arith.constant dense<0.000000e+00> : vector<12x96xf32>
    %13 = tpu.matmul %6, %12, %cst_12 {dimension_numbers = #tpu.dot_dimension_numbers<[1], [0], [0], [1], [0, 0, 1, 1], [], []>} : vector<12x32xf32>, vector<32x96xf32>, vector<12x96xf32> -> vector<12x96xf32>
    %c1 = arith.constant 1 : index
    %c0_13 = arith.constant 0 : index
    %14 = vector.load %arg5[%c1, %c0_13] : memref<16x128xf32, #tpu.memory_space<vmem>>, vector<1x96xf32>
    %15 = vector.broadcast %14 : vector<1x96xf32> to vector<12x96xf32>
    %16 = arith.addf %13, %15 : vector<12x96xf32>
    %cst_14 = arith.constant 0.000000e+00 : f32
    %17 = vector.broadcast %cst_14 : f32 to vector<2x32xf32>
    %cst_15 = arith.constant 0.000000e+00 : f32
    %18 = vector.broadcast %cst_15 : f32 to vector<2x32xf32>
    %cst_16 = arith.constant dense<0.000000e+00> : vector<2x96xf32>
    %19 = tpu.matmul %17, %0, %cst_16 {dimension_numbers = #tpu.dot_dimension_numbers<[1], [0], [0], [1], [0, 0, 1, 1], [], []>} : vector<2x32xf32>, vector<32x96xf32>, vector<2x96xf32> -> vector<2x96xf32>
    %cst_17 = arith.constant dense<0.000000e+00> : vector<2x96xf32>
    %20 = tpu.matmul %18, %1, %cst_17 {dimension_numbers = #tpu.dot_dimension_numbers<[1], [0], [0], [1], [0, 0, 1, 1], [], []>} : vector<2x32xf32>, vector<32x96xf32>, vector<2x96xf32> -> vector<2x96xf32>
    %21 = vector.extract_strided_slice %11 {offsets = [0, 0], sizes = [2, 96], strides = [1, 1]} : vector<12x96xf32> to vector<2x96xf32>
    %22 = vector.extract_strided_slice %21 {offsets = [0, 0], sizes = [2, 64], strides = [1, 1]} : vector<2x96xf32> to vector<2x64xf32>
    %23 = vector.extract_strided_slice %19 {offsets = [0, 0], sizes = [2, 64], strides = [1, 1]} : vector<2x96xf32> to vector<2x64xf32>
    %24 = arith.addf %22, %23 : vector<2x64xf32>
    %25 = arith.negf %24 : vector<2x64xf32>
    %26 = math.exp %25 : vector<2x64xf32>
    %cst_18 = arith.constant 1.000000e+00 : f32
    %27 = vector.broadcast %cst_18 : f32 to vector<2x64xf32>
    %28 = arith.addf %27, %26 : vector<2x64xf32>
    %29 = arith.divf %27, %28 : vector<2x64xf32>
    %30 = vector.extract_strided_slice %21 {offsets = [0, 64], sizes = [2, 32], strides = [1, 1]} : vector<2x96xf32> to vector<2x32xf32>
    %31 = vector.extract_strided_slice %29 {offsets = [0, 0], sizes = [2, 32], strides = [1, 1]} : vector<2x64xf32> to vector<2x32xf32>
    %32 = vector.extract_strided_slice %19 {offsets = [0, 64], sizes = [2, 32], strides = [1, 1]} : vector<2x96xf32> to vector<2x32xf32>
    %33 = vector.broadcast %3 : vector<1x32xf32> to vector<2x32xf32>
    %34 = arith.addf %32, %33 : vector<2x32xf32>
    %35 = arith.mulf %31, %34 : vector<2x32xf32>
    %36 = arith.addf %30, %35 : vector<2x32xf32>
    %37 = math.tanh %36 : vector<2x32xf32>
    %38 = vector.extract_strided_slice %29 {offsets = [0, 32], sizes = [2, 32], strides = [1, 1]} : vector<2x64xf32> to vector<2x32xf32>
    %39 = arith.subf %17, %37 : vector<2x32xf32>
    %40 = arith.mulf %38, %39 : vector<2x32xf32>
    %41 = arith.addf %37, %40 : vector<2x32xf32>
    %42 = vector.extract_strided_slice %16 {offsets = [10, 0], sizes = [2, 96], strides = [1, 1]} : vector<12x96xf32> to vector<2x96xf32>
    %43 = vector.extract_strided_slice %42 {offsets = [0, 0], sizes = [2, 64], strides = [1, 1]} : vector<2x96xf32> to vector<2x64xf32>
    %44 = vector.extract_strided_slice %20 {offsets = [0, 0], sizes = [2, 64], strides = [1, 1]} : vector<2x96xf32> to vector<2x64xf32>
    %45 = arith.addf %43, %44 : vector<2x64xf32>
    %46 = arith.negf %45 : vector<2x64xf32>
    %47 = math.exp %46 : vector<2x64xf32>
    %cst_19 = arith.constant 1.000000e+00 : f32
    %48 = vector.broadcast %cst_19 : f32 to vector<2x64xf32>
    %49 = arith.addf %48, %47 : vector<2x64xf32>
    %50 = arith.divf %48, %49 : vector<2x64xf32>
    %51 = vector.extract_strided_slice %42 {offsets = [0, 64], sizes = [2, 32], strides = [1, 1]} : vector<2x96xf32> to vector<2x32xf32>
    %52 = vector.extract_strided_slice %50 {offsets = [0, 0], sizes = [2, 32], strides = [1, 1]} : vector<2x64xf32> to vector<2x32xf32>
    %53 = vector.extract_strided_slice %20 {offsets = [0, 64], sizes = [2, 32], strides = [1, 1]} : vector<2x96xf32> to vector<2x32xf32>
    %54 = vector.broadcast %4 : vector<1x32xf32> to vector<2x32xf32>
    %55 = arith.addf %53, %54 : vector<2x32xf32>
    %56 = arith.mulf %52, %55 : vector<2x32xf32>
    %57 = arith.addf %51, %56 : vector<2x32xf32>
    %58 = math.tanh %57 : vector<2x32xf32>
    %59 = vector.extract_strided_slice %50 {offsets = [0, 32], sizes = [2, 32], strides = [1, 1]} : vector<2x64xf32> to vector<2x32xf32>
    %60 = arith.subf %18, %58 : vector<2x32xf32>
    %61 = arith.mulf %59, %60 : vector<2x32xf32>
    %62 = arith.addf %58, %61 : vector<2x32xf32>
    %cst_20 = arith.constant dense<0.000000e+00> : vector<2x96xf32>
    %63 = tpu.matmul %41, %0, %cst_20 {dimension_numbers = #tpu.dot_dimension_numbers<[1], [0], [0], [1], [0, 0, 1, 1], [], []>} : vector<2x32xf32>, vector<32x96xf32>, vector<2x96xf32> -> vector<2x96xf32>
    %cst_21 = arith.constant dense<0.000000e+00> : vector<2x96xf32>
    %64 = tpu.matmul %62, %1, %cst_21 {dimension_numbers = #tpu.dot_dimension_numbers<[1], [0], [0], [1], [0, 0, 1, 1], [], []>} : vector<2x32xf32>, vector<32x96xf32>, vector<2x96xf32> -> vector<2x96xf32>
    %65 = vector.extract_strided_slice %11 {offsets = [2, 0], sizes = [2, 96], strides = [1, 1]} : vector<12x96xf32> to vector<2x96xf32>
    %66 = vector.extract_strided_slice %65 {offsets = [0, 0], sizes = [2, 64], strides = [1, 1]} : vector<2x96xf32> to vector<2x64xf32>
    %67 = vector.extract_strided_slice %63 {offsets = [0, 0], sizes = [2, 64], strides = [1, 1]} : vector<2x96xf32> to vector<2x64xf32>
    %68 = arith.addf %66, %67 : vector<2x64xf32>
    %69 = arith.negf %68 : vector<2x64xf32>
    %70 = math.exp %69 : vector<2x64xf32>
    %cst_22 = arith.constant 1.000000e+00 : f32
    %71 = vector.broadcast %cst_22 : f32 to vector<2x64xf32>
    %72 = arith.addf %71, %70 : vector<2x64xf32>
    %73 = arith.divf %71, %72 : vector<2x64xf32>
    %74 = vector.extract_strided_slice %65 {offsets = [0, 64], sizes = [2, 32], strides = [1, 1]} : vector<2x96xf32> to vector<2x32xf32>
    %75 = vector.extract_strided_slice %73 {offsets = [0, 0], sizes = [2, 32], strides = [1, 1]} : vector<2x64xf32> to vector<2x32xf32>
    %76 = vector.extract_strided_slice %63 {offsets = [0, 64], sizes = [2, 32], strides = [1, 1]} : vector<2x96xf32> to vector<2x32xf32>
    %77 = vector.broadcast %3 : vector<1x32xf32> to vector<2x32xf32>
    %78 = arith.addf %76, %77 : vector<2x32xf32>
    %79 = arith.mulf %75, %78 : vector<2x32xf32>
    %80 = arith.addf %74, %79 : vector<2x32xf32>
    %81 = math.tanh %80 : vector<2x32xf32>
    %82 = vector.extract_strided_slice %73 {offsets = [0, 32], sizes = [2, 32], strides = [1, 1]} : vector<2x64xf32> to vector<2x32xf32>
    %83 = arith.subf %41, %81 : vector<2x32xf32>
    %84 = arith.mulf %82, %83 : vector<2x32xf32>
    %85 = arith.addf %81, %84 : vector<2x32xf32>
    %86 = vector.extract_strided_slice %16 {offsets = [8, 0], sizes = [2, 96], strides = [1, 1]} : vector<12x96xf32> to vector<2x96xf32>
    %87 = vector.extract_strided_slice %86 {offsets = [0, 0], sizes = [2, 64], strides = [1, 1]} : vector<2x96xf32> to vector<2x64xf32>
    %88 = vector.extract_strided_slice %64 {offsets = [0, 0], sizes = [2, 64], strides = [1, 1]} : vector<2x96xf32> to vector<2x64xf32>
    %89 = arith.addf %87, %88 : vector<2x64xf32>
    %90 = arith.negf %89 : vector<2x64xf32>
    %91 = math.exp %90 : vector<2x64xf32>
    %cst_23 = arith.constant 1.000000e+00 : f32
    %92 = vector.broadcast %cst_23 : f32 to vector<2x64xf32>
    %93 = arith.addf %92, %91 : vector<2x64xf32>
    %94 = arith.divf %92, %93 : vector<2x64xf32>
    %95 = vector.extract_strided_slice %86 {offsets = [0, 64], sizes = [2, 32], strides = [1, 1]} : vector<2x96xf32> to vector<2x32xf32>
    %96 = vector.extract_strided_slice %94 {offsets = [0, 0], sizes = [2, 32], strides = [1, 1]} : vector<2x64xf32> to vector<2x32xf32>
    %97 = vector.extract_strided_slice %64 {offsets = [0, 64], sizes = [2, 32], strides = [1, 1]} : vector<2x96xf32> to vector<2x32xf32>
    %98 = vector.broadcast %4 : vector<1x32xf32> to vector<2x32xf32>
    %99 = arith.addf %97, %98 : vector<2x32xf32>
    %100 = arith.mulf %96, %99 : vector<2x32xf32>
    %101 = arith.addf %95, %100 : vector<2x32xf32>
    %102 = math.tanh %101 : vector<2x32xf32>
    %103 = vector.extract_strided_slice %94 {offsets = [0, 32], sizes = [2, 32], strides = [1, 1]} : vector<2x64xf32> to vector<2x32xf32>
    %104 = arith.subf %62, %102 : vector<2x32xf32>
    %105 = arith.mulf %103, %104 : vector<2x32xf32>
    %106 = arith.addf %102, %105 : vector<2x32xf32>
    %cst_24 = arith.constant dense<0.000000e+00> : vector<2x96xf32>
    %107 = tpu.matmul %85, %0, %cst_24 {dimension_numbers = #tpu.dot_dimension_numbers<[1], [0], [0], [1], [0, 0, 1, 1], [], []>} : vector<2x32xf32>, vector<32x96xf32>, vector<2x96xf32> -> vector<2x96xf32>
    %cst_25 = arith.constant dense<0.000000e+00> : vector<2x96xf32>
    %108 = tpu.matmul %106, %1, %cst_25 {dimension_numbers = #tpu.dot_dimension_numbers<[1], [0], [0], [1], [0, 0, 1, 1], [], []>} : vector<2x32xf32>, vector<32x96xf32>, vector<2x96xf32> -> vector<2x96xf32>
    %109 = vector.extract_strided_slice %11 {offsets = [4, 0], sizes = [2, 96], strides = [1, 1]} : vector<12x96xf32> to vector<2x96xf32>
    %110 = vector.extract_strided_slice %109 {offsets = [0, 0], sizes = [2, 64], strides = [1, 1]} : vector<2x96xf32> to vector<2x64xf32>
    %111 = vector.extract_strided_slice %107 {offsets = [0, 0], sizes = [2, 64], strides = [1, 1]} : vector<2x96xf32> to vector<2x64xf32>
    %112 = arith.addf %110, %111 : vector<2x64xf32>
    %113 = arith.negf %112 : vector<2x64xf32>
    %114 = math.exp %113 : vector<2x64xf32>
    %cst_26 = arith.constant 1.000000e+00 : f32
    %115 = vector.broadcast %cst_26 : f32 to vector<2x64xf32>
    %116 = arith.addf %115, %114 : vector<2x64xf32>
    %117 = arith.divf %115, %116 : vector<2x64xf32>
    %118 = vector.extract_strided_slice %109 {offsets = [0, 64], sizes = [2, 32], strides = [1, 1]} : vector<2x96xf32> to vector<2x32xf32>
    %119 = vector.extract_strided_slice %117 {offsets = [0, 0], sizes = [2, 32], strides = [1, 1]} : vector<2x64xf32> to vector<2x32xf32>
    %120 = vector.extract_strided_slice %107 {offsets = [0, 64], sizes = [2, 32], strides = [1, 1]} : vector<2x96xf32> to vector<2x32xf32>
    %121 = vector.broadcast %3 : vector<1x32xf32> to vector<2x32xf32>
    %122 = arith.addf %120, %121 : vector<2x32xf32>
    %123 = arith.mulf %119, %122 : vector<2x32xf32>
    %124 = arith.addf %118, %123 : vector<2x32xf32>
    %125 = math.tanh %124 : vector<2x32xf32>
    %126 = vector.extract_strided_slice %117 {offsets = [0, 32], sizes = [2, 32], strides = [1, 1]} : vector<2x64xf32> to vector<2x32xf32>
    %127 = arith.subf %85, %125 : vector<2x32xf32>
    %128 = arith.mulf %126, %127 : vector<2x32xf32>
    %129 = arith.addf %125, %128 : vector<2x32xf32>
    %130 = vector.extract_strided_slice %16 {offsets = [6, 0], sizes = [2, 96], strides = [1, 1]} : vector<12x96xf32> to vector<2x96xf32>
    %131 = vector.extract_strided_slice %130 {offsets = [0, 0], sizes = [2, 64], strides = [1, 1]} : vector<2x96xf32> to vector<2x64xf32>
    %132 = vector.extract_strided_slice %108 {offsets = [0, 0], sizes = [2, 64], strides = [1, 1]} : vector<2x96xf32> to vector<2x64xf32>
    %133 = arith.addf %131, %132 : vector<2x64xf32>
    %134 = arith.negf %133 : vector<2x64xf32>
    %135 = math.exp %134 : vector<2x64xf32>
    %cst_27 = arith.constant 1.000000e+00 : f32
    %136 = vector.broadcast %cst_27 : f32 to vector<2x64xf32>
    %137 = arith.addf %136, %135 : vector<2x64xf32>
    %138 = arith.divf %136, %137 : vector<2x64xf32>
    %139 = vector.extract_strided_slice %130 {offsets = [0, 64], sizes = [2, 32], strides = [1, 1]} : vector<2x96xf32> to vector<2x32xf32>
    %140 = vector.extract_strided_slice %138 {offsets = [0, 0], sizes = [2, 32], strides = [1, 1]} : vector<2x64xf32> to vector<2x32xf32>
    %141 = vector.extract_strided_slice %108 {offsets = [0, 64], sizes = [2, 32], strides = [1, 1]} : vector<2x96xf32> to vector<2x32xf32>
    %142 = vector.broadcast %4 : vector<1x32xf32> to vector<2x32xf32>
    %143 = arith.addf %141, %142 : vector<2x32xf32>
    %144 = arith.mulf %140, %143 : vector<2x32xf32>
    %145 = arith.addf %139, %144 : vector<2x32xf32>
    %146 = math.tanh %145 : vector<2x32xf32>
    %147 = vector.extract_strided_slice %138 {offsets = [0, 32], sizes = [2, 32], strides = [1, 1]} : vector<2x64xf32> to vector<2x32xf32>
    %148 = arith.subf %106, %146 : vector<2x32xf32>
    %149 = arith.mulf %147, %148 : vector<2x32xf32>
    %150 = arith.addf %146, %149 : vector<2x32xf32>
    %cst_28 = arith.constant dense<0.000000e+00> : vector<2x96xf32>
    %151 = tpu.matmul %129, %0, %cst_28 {dimension_numbers = #tpu.dot_dimension_numbers<[1], [0], [0], [1], [0, 0, 1, 1], [], []>} : vector<2x32xf32>, vector<32x96xf32>, vector<2x96xf32> -> vector<2x96xf32>
    %cst_29 = arith.constant dense<0.000000e+00> : vector<2x96xf32>
    %152 = tpu.matmul %150, %1, %cst_29 {dimension_numbers = #tpu.dot_dimension_numbers<[1], [0], [0], [1], [0, 0, 1, 1], [], []>} : vector<2x32xf32>, vector<32x96xf32>, vector<2x96xf32> -> vector<2x96xf32>
    %153 = vector.extract_strided_slice %11 {offsets = [6, 0], sizes = [2, 96], strides = [1, 1]} : vector<12x96xf32> to vector<2x96xf32>
    %154 = vector.extract_strided_slice %153 {offsets = [0, 0], sizes = [2, 64], strides = [1, 1]} : vector<2x96xf32> to vector<2x64xf32>
    %155 = vector.extract_strided_slice %151 {offsets = [0, 0], sizes = [2, 64], strides = [1, 1]} : vector<2x96xf32> to vector<2x64xf32>
    %156 = arith.addf %154, %155 : vector<2x64xf32>
    %157 = arith.negf %156 : vector<2x64xf32>
    %158 = math.exp %157 : vector<2x64xf32>
    %cst_30 = arith.constant 1.000000e+00 : f32
    %159 = vector.broadcast %cst_30 : f32 to vector<2x64xf32>
    %160 = arith.addf %159, %158 : vector<2x64xf32>
    %161 = arith.divf %159, %160 : vector<2x64xf32>
    %162 = vector.extract_strided_slice %153 {offsets = [0, 64], sizes = [2, 32], strides = [1, 1]} : vector<2x96xf32> to vector<2x32xf32>
    %163 = vector.extract_strided_slice %161 {offsets = [0, 0], sizes = [2, 32], strides = [1, 1]} : vector<2x64xf32> to vector<2x32xf32>
    %164 = vector.extract_strided_slice %151 {offsets = [0, 64], sizes = [2, 32], strides = [1, 1]} : vector<2x96xf32> to vector<2x32xf32>
    %165 = vector.broadcast %3 : vector<1x32xf32> to vector<2x32xf32>
    %166 = arith.addf %164, %165 : vector<2x32xf32>
    %167 = arith.mulf %163, %166 : vector<2x32xf32>
    %168 = arith.addf %162, %167 : vector<2x32xf32>
    %169 = math.tanh %168 : vector<2x32xf32>
    %170 = vector.extract_strided_slice %161 {offsets = [0, 32], sizes = [2, 32], strides = [1, 1]} : vector<2x64xf32> to vector<2x32xf32>
    %171 = arith.subf %129, %169 : vector<2x32xf32>
    %172 = arith.mulf %170, %171 : vector<2x32xf32>
    %173 = arith.addf %169, %172 : vector<2x32xf32>
    %174 = vector.extract_strided_slice %16 {offsets = [4, 0], sizes = [2, 96], strides = [1, 1]} : vector<12x96xf32> to vector<2x96xf32>
    %175 = vector.extract_strided_slice %174 {offsets = [0, 0], sizes = [2, 64], strides = [1, 1]} : vector<2x96xf32> to vector<2x64xf32>
    %176 = vector.extract_strided_slice %152 {offsets = [0, 0], sizes = [2, 64], strides = [1, 1]} : vector<2x96xf32> to vector<2x64xf32>
    %177 = arith.addf %175, %176 : vector<2x64xf32>
    %178 = arith.negf %177 : vector<2x64xf32>
    %179 = math.exp %178 : vector<2x64xf32>
    %cst_31 = arith.constant 1.000000e+00 : f32
    %180 = vector.broadcast %cst_31 : f32 to vector<2x64xf32>
    %181 = arith.addf %180, %179 : vector<2x64xf32>
    %182 = arith.divf %180, %181 : vector<2x64xf32>
    %183 = vector.extract_strided_slice %174 {offsets = [0, 64], sizes = [2, 32], strides = [1, 1]} : vector<2x96xf32> to vector<2x32xf32>
    %184 = vector.extract_strided_slice %182 {offsets = [0, 0], sizes = [2, 32], strides = [1, 1]} : vector<2x64xf32> to vector<2x32xf32>
    %185 = vector.extract_strided_slice %152 {offsets = [0, 64], sizes = [2, 32], strides = [1, 1]} : vector<2x96xf32> to vector<2x32xf32>
    %186 = vector.broadcast %4 : vector<1x32xf32> to vector<2x32xf32>
    %187 = arith.addf %185, %186 : vector<2x32xf32>
    %188 = arith.mulf %184, %187 : vector<2x32xf32>
    %189 = arith.addf %183, %188 : vector<2x32xf32>
    %190 = math.tanh %189 : vector<2x32xf32>
    %191 = vector.extract_strided_slice %182 {offsets = [0, 32], sizes = [2, 32], strides = [1, 1]} : vector<2x64xf32> to vector<2x32xf32>
    %192 = arith.subf %150, %190 : vector<2x32xf32>
    %193 = arith.mulf %191, %192 : vector<2x32xf32>
    %194 = arith.addf %190, %193 : vector<2x32xf32>
    %cst_32 = arith.constant dense<0.000000e+00> : vector<2x96xf32>
    %195 = tpu.matmul %173, %0, %cst_32 {dimension_numbers = #tpu.dot_dimension_numbers<[1], [0], [0], [1], [0, 0, 1, 1], [], []>} : vector<2x32xf32>, vector<32x96xf32>, vector<2x96xf32> -> vector<2x96xf32>
    %cst_33 = arith.constant dense<0.000000e+00> : vector<2x96xf32>
    %196 = tpu.matmul %194, %1, %cst_33 {dimension_numbers = #tpu.dot_dimension_numbers<[1], [0], [0], [1], [0, 0, 1, 1], [], []>} : vector<2x32xf32>, vector<32x96xf32>, vector<2x96xf32> -> vector<2x96xf32>
    %197 = vector.extract_strided_slice %11 {offsets = [8, 0], sizes = [2, 96], strides = [1, 1]} : vector<12x96xf32> to vector<2x96xf32>
    %198 = vector.extract_strided_slice %197 {offsets = [0, 0], sizes = [2, 64], strides = [1, 1]} : vector<2x96xf32> to vector<2x64xf32>
    %199 = vector.extract_strided_slice %195 {offsets = [0, 0], sizes = [2, 64], strides = [1, 1]} : vector<2x96xf32> to vector<2x64xf32>
    %200 = arith.addf %198, %199 : vector<2x64xf32>
    %201 = arith.negf %200 : vector<2x64xf32>
    %202 = math.exp %201 : vector<2x64xf32>
    %cst_34 = arith.constant 1.000000e+00 : f32
    %203 = vector.broadcast %cst_34 : f32 to vector<2x64xf32>
    %204 = arith.addf %203, %202 : vector<2x64xf32>
    %205 = arith.divf %203, %204 : vector<2x64xf32>
    %206 = vector.extract_strided_slice %197 {offsets = [0, 64], sizes = [2, 32], strides = [1, 1]} : vector<2x96xf32> to vector<2x32xf32>
    %207 = vector.extract_strided_slice %205 {offsets = [0, 0], sizes = [2, 32], strides = [1, 1]} : vector<2x64xf32> to vector<2x32xf32>
    %208 = vector.extract_strided_slice %195 {offsets = [0, 64], sizes = [2, 32], strides = [1, 1]} : vector<2x96xf32> to vector<2x32xf32>
    %209 = vector.broadcast %3 : vector<1x32xf32> to vector<2x32xf32>
    %210 = arith.addf %208, %209 : vector<2x32xf32>
    %211 = arith.mulf %207, %210 : vector<2x32xf32>
    %212 = arith.addf %206, %211 : vector<2x32xf32>
    %213 = math.tanh %212 : vector<2x32xf32>
    %214 = vector.extract_strided_slice %205 {offsets = [0, 32], sizes = [2, 32], strides = [1, 1]} : vector<2x64xf32> to vector<2x32xf32>
    %215 = arith.subf %173, %213 : vector<2x32xf32>
    %216 = arith.mulf %214, %215 : vector<2x32xf32>
    %217 = arith.addf %213, %216 : vector<2x32xf32>
    %218 = vector.extract_strided_slice %16 {offsets = [2, 0], sizes = [2, 96], strides = [1, 1]} : vector<12x96xf32> to vector<2x96xf32>
    %219 = vector.extract_strided_slice %218 {offsets = [0, 0], sizes = [2, 64], strides = [1, 1]} : vector<2x96xf32> to vector<2x64xf32>
    %220 = vector.extract_strided_slice %196 {offsets = [0, 0], sizes = [2, 64], strides = [1, 1]} : vector<2x96xf32> to vector<2x64xf32>
    %221 = arith.addf %219, %220 : vector<2x64xf32>
    %222 = arith.negf %221 : vector<2x64xf32>
    %223 = math.exp %222 : vector<2x64xf32>
    %cst_35 = arith.constant 1.000000e+00 : f32
    %224 = vector.broadcast %cst_35 : f32 to vector<2x64xf32>
    %225 = arith.addf %224, %223 : vector<2x64xf32>
    %226 = arith.divf %224, %225 : vector<2x64xf32>
    %227 = vector.extract_strided_slice %218 {offsets = [0, 64], sizes = [2, 32], strides = [1, 1]} : vector<2x96xf32> to vector<2x32xf32>
    %228 = vector.extract_strided_slice %226 {offsets = [0, 0], sizes = [2, 32], strides = [1, 1]} : vector<2x64xf32> to vector<2x32xf32>
    %229 = vector.extract_strided_slice %196 {offsets = [0, 64], sizes = [2, 32], strides = [1, 1]} : vector<2x96xf32> to vector<2x32xf32>
    %230 = vector.broadcast %4 : vector<1x32xf32> to vector<2x32xf32>
    %231 = arith.addf %229, %230 : vector<2x32xf32>
    %232 = arith.mulf %228, %231 : vector<2x32xf32>
    %233 = arith.addf %227, %232 : vector<2x32xf32>
    %234 = math.tanh %233 : vector<2x32xf32>
    %235 = vector.extract_strided_slice %226 {offsets = [0, 32], sizes = [2, 32], strides = [1, 1]} : vector<2x64xf32> to vector<2x32xf32>
    %236 = arith.subf %194, %234 : vector<2x32xf32>
    %237 = arith.mulf %235, %236 : vector<2x32xf32>
    %238 = arith.addf %234, %237 : vector<2x32xf32>
    %cst_36 = arith.constant dense<0.000000e+00> : vector<2x96xf32>
    %239 = tpu.matmul %217, %0, %cst_36 {dimension_numbers = #tpu.dot_dimension_numbers<[1], [0], [0], [1], [0, 0, 1, 1], [], []>} : vector<2x32xf32>, vector<32x96xf32>, vector<2x96xf32> -> vector<2x96xf32>
    %cst_37 = arith.constant dense<0.000000e+00> : vector<2x96xf32>
    %240 = tpu.matmul %238, %1, %cst_37 {dimension_numbers = #tpu.dot_dimension_numbers<[1], [0], [0], [1], [0, 0, 1, 1], [], []>} : vector<2x32xf32>, vector<32x96xf32>, vector<2x96xf32> -> vector<2x96xf32>
    %241 = vector.extract_strided_slice %11 {offsets = [10, 0], sizes = [2, 96], strides = [1, 1]} : vector<12x96xf32> to vector<2x96xf32>
    %242 = vector.extract_strided_slice %241 {offsets = [0, 0], sizes = [2, 64], strides = [1, 1]} : vector<2x96xf32> to vector<2x64xf32>
    %243 = vector.extract_strided_slice %239 {offsets = [0, 0], sizes = [2, 64], strides = [1, 1]} : vector<2x96xf32> to vector<2x64xf32>
    %244 = arith.addf %242, %243 : vector<2x64xf32>
    %245 = arith.negf %244 : vector<2x64xf32>
    %246 = math.exp %245 : vector<2x64xf32>
    %cst_38 = arith.constant 1.000000e+00 : f32
    %247 = vector.broadcast %cst_38 : f32 to vector<2x64xf32>
    %248 = arith.addf %247, %246 : vector<2x64xf32>
    %249 = arith.divf %247, %248 : vector<2x64xf32>
    %250 = vector.extract_strided_slice %241 {offsets = [0, 64], sizes = [2, 32], strides = [1, 1]} : vector<2x96xf32> to vector<2x32xf32>
    %251 = vector.extract_strided_slice %249 {offsets = [0, 0], sizes = [2, 32], strides = [1, 1]} : vector<2x64xf32> to vector<2x32xf32>
    %252 = vector.extract_strided_slice %239 {offsets = [0, 64], sizes = [2, 32], strides = [1, 1]} : vector<2x96xf32> to vector<2x32xf32>
    %253 = vector.broadcast %3 : vector<1x32xf32> to vector<2x32xf32>
    %254 = arith.addf %252, %253 : vector<2x32xf32>
    %255 = arith.mulf %251, %254 : vector<2x32xf32>
    %256 = arith.addf %250, %255 : vector<2x32xf32>
    %257 = math.tanh %256 : vector<2x32xf32>
    %258 = vector.extract_strided_slice %249 {offsets = [0, 32], sizes = [2, 32], strides = [1, 1]} : vector<2x64xf32> to vector<2x32xf32>
    %259 = arith.subf %217, %257 : vector<2x32xf32>
    %260 = arith.mulf %258, %259 : vector<2x32xf32>
    %261 = arith.addf %257, %260 : vector<2x32xf32>
    %262 = vector.extract_strided_slice %16 {offsets = [0, 0], sizes = [2, 96], strides = [1, 1]} : vector<12x96xf32> to vector<2x96xf32>
    %263 = vector.extract_strided_slice %262 {offsets = [0, 0], sizes = [2, 64], strides = [1, 1]} : vector<2x96xf32> to vector<2x64xf32>
    %264 = vector.extract_strided_slice %240 {offsets = [0, 0], sizes = [2, 64], strides = [1, 1]} : vector<2x96xf32> to vector<2x64xf32>
    %265 = arith.addf %263, %264 : vector<2x64xf32>
    %266 = arith.negf %265 : vector<2x64xf32>
    %267 = math.exp %266 : vector<2x64xf32>
    %cst_39 = arith.constant 1.000000e+00 : f32
    %268 = vector.broadcast %cst_39 : f32 to vector<2x64xf32>
    %269 = arith.addf %268, %267 : vector<2x64xf32>
    %270 = arith.divf %268, %269 : vector<2x64xf32>
    %271 = vector.extract_strided_slice %262 {offsets = [0, 64], sizes = [2, 32], strides = [1, 1]} : vector<2x96xf32> to vector<2x32xf32>
    %272 = vector.extract_strided_slice %270 {offsets = [0, 0], sizes = [2, 32], strides = [1, 1]} : vector<2x64xf32> to vector<2x32xf32>
    %273 = vector.extract_strided_slice %240 {offsets = [0, 64], sizes = [2, 32], strides = [1, 1]} : vector<2x96xf32> to vector<2x32xf32>
    %274 = vector.broadcast %4 : vector<1x32xf32> to vector<2x32xf32>
    %275 = arith.addf %273, %274 : vector<2x32xf32>
    %276 = arith.mulf %272, %275 : vector<2x32xf32>
    %277 = arith.addf %271, %276 : vector<2x32xf32>
    %278 = math.tanh %277 : vector<2x32xf32>
    %279 = vector.extract_strided_slice %270 {offsets = [0, 32], sizes = [2, 32], strides = [1, 1]} : vector<2x64xf32> to vector<2x32xf32>
    %280 = arith.subf %238, %278 : vector<2x32xf32>
    %281 = arith.mulf %279, %280 : vector<2x32xf32>
    %282 = arith.addf %278, %281 : vector<2x32xf32>
    %283 = tpu.concatenate %261, %282 in 1 : vector<2x32xf32>, vector<2x32xf32> -> vector<2x64xf32>
    %c0_40 = arith.constant 0 : index
    %c0_41 = arith.constant 0 : index
    %284 = vector.load %arg1[%c0_40, %c0_41] : memref<16x8xf32, #tpu.memory_space<vmem>>, vector<16x8xf32>
    %c0_42 = arith.constant 0 : index
    %c0_43 = arith.constant 0 : index
    %285 = vector.load %arg4[%c0_42, %c0_43] : memref<72x96xf32, #tpu.memory_space<vmem>>, vector<8x96xf32>
    %cst_44 = arith.constant dense<0.000000e+00> : vector<16x96xf32>
    %286 = tpu.matmul %284, %285, %cst_44 {dimension_numbers = #tpu.dot_dimension_numbers<[1], [0], [0], [1], [0, 0, 1, 1], [], []>} : vector<16x8xf32>, vector<8x96xf32>, vector<16x96xf32> -> vector<16x96xf32>
    %c8 = arith.constant 8 : index
    %c0_45 = arith.constant 0 : index
    %287 = vector.load %arg4[%c8, %c0_45] : memref<72x96xf32, #tpu.memory_space<vmem>>, vector<64x96xf32>
    %cst_46 = arith.constant dense<0.000000e+00> : vector<2x96xf32>
    %288 = tpu.matmul %283, %287, %cst_46 {dimension_numbers = #tpu.dot_dimension_numbers<[1], [0], [0], [1], [0, 0, 1, 1], [], []>} : vector<2x64xf32>, vector<64x96xf32>, vector<2x96xf32> -> vector<2x96xf32>
    %c4 = arith.constant 4 : index
    %c0_47 = arith.constant 0 : index
    %289 = vector.load %arg5[%c4, %c0_47] : memref<16x128xf32, #tpu.memory_space<vmem>>, vector<1x96xf32>
    %290 = vector.broadcast %289 : vector<1x96xf32> to vector<2x96xf32>
    %291 = arith.addf %288, %290 : vector<2x96xf32>
    %c0_48 = arith.constant 0 : index
    %c0_49 = arith.constant 0 : index
    %292 = vector.load %arg2[%c0_48, %c0_49] : memref<2x32xf32, #tpu.memory_space<vmem>>, vector<2x32xf32>
    %293 = vector.extract_strided_slice %286 {offsets = [0, 0], sizes = [2, 96], strides = [1, 1]} : vector<16x96xf32> to vector<2x96xf32>
    %294 = arith.addf %293, %291 : vector<2x96xf32>
    %cst_50 = arith.constant dense<0.000000e+00> : vector<2x96xf32>
    %295 = tpu.matmul %292, %2, %cst_50 {dimension_numbers = #tpu.dot_dimension_numbers<[1], [0], [0], [1], [0, 0, 1, 1], [], []>} : vector<2x32xf32>, vector<32x96xf32>, vector<2x96xf32> -> vector<2x96xf32>
    %296 = vector.extract_strided_slice %294 {offsets = [0, 0], sizes = [2, 64], strides = [1, 1]} : vector<2x96xf32> to vector<2x64xf32>
    %297 = vector.extract_strided_slice %295 {offsets = [0, 0], sizes = [2, 64], strides = [1, 1]} : vector<2x96xf32> to vector<2x64xf32>
    %298 = arith.addf %296, %297 : vector<2x64xf32>
    %299 = arith.negf %298 : vector<2x64xf32>
    %300 = math.exp %299 : vector<2x64xf32>
    %cst_51 = arith.constant 1.000000e+00 : f32
    %301 = vector.broadcast %cst_51 : f32 to vector<2x64xf32>
    %302 = arith.addf %301, %300 : vector<2x64xf32>
    %303 = arith.divf %301, %302 : vector<2x64xf32>
    %304 = vector.extract_strided_slice %294 {offsets = [0, 64], sizes = [2, 32], strides = [1, 1]} : vector<2x96xf32> to vector<2x32xf32>
    %305 = vector.extract_strided_slice %303 {offsets = [0, 0], sizes = [2, 32], strides = [1, 1]} : vector<2x64xf32> to vector<2x32xf32>
    %306 = vector.extract_strided_slice %295 {offsets = [0, 64], sizes = [2, 32], strides = [1, 1]} : vector<2x96xf32> to vector<2x32xf32>
    %307 = vector.broadcast %5 : vector<1x32xf32> to vector<2x32xf32>
    %308 = arith.addf %306, %307 : vector<2x32xf32>
    %309 = arith.mulf %305, %308 : vector<2x32xf32>
    %310 = arith.addf %304, %309 : vector<2x32xf32>
    %311 = math.tanh %310 : vector<2x32xf32>
    %312 = vector.extract_strided_slice %303 {offsets = [0, 32], sizes = [2, 32], strides = [1, 1]} : vector<2x64xf32> to vector<2x32xf32>
    %313 = arith.subf %292, %311 : vector<2x32xf32>
    %314 = arith.mulf %312, %313 : vector<2x32xf32>
    %315 = arith.addf %311, %314 : vector<2x32xf32>
    %c0_52 = arith.constant 0 : index
    %c0_53 = arith.constant 0 : index
    %316 = vector.load %arg6[%c0_52, %c0_53] : memref<16x41xf32, #tpu.memory_space<vmem>>, vector<2x32xf32>
    tpu.vector_store %arg6[%c0_52, %c0_53], %315 {strides = array<i32>} : memref<16x41xf32, #tpu.memory_space<vmem>>, vector<2x32xf32>,
    %317 = vector.extract_strided_slice %286 {offsets = [2, 0], sizes = [2, 96], strides = [1, 1]} : vector<16x96xf32> to vector<2x96xf32>
    %318 = arith.addf %317, %291 : vector<2x96xf32>
    %cst_54 = arith.constant dense<0.000000e+00> : vector<2x96xf32>
    %319 = tpu.matmul %315, %2, %cst_54 {dimension_numbers = #tpu.dot_dimension_numbers<[1], [0], [0], [1], [0, 0, 1, 1], [], []>} : vector<2x32xf32>, vector<32x96xf32>, vector<2x96xf32> -> vector<2x96xf32>
    %320 = vector.extract_strided_slice %318 {offsets = [0, 0], sizes = [2, 64], strides = [1, 1]} : vector<2x96xf32> to vector<2x64xf32>
    %321 = vector.extract_strided_slice %319 {offsets = [0, 0], sizes = [2, 64], strides = [1, 1]} : vector<2x96xf32> to vector<2x64xf32>
    %322 = arith.addf %320, %321 : vector<2x64xf32>
    %323 = arith.negf %322 : vector<2x64xf32>
    %324 = math.exp %323 : vector<2x64xf32>
    %cst_55 = arith.constant 1.000000e+00 : f32
    %325 = vector.broadcast %cst_55 : f32 to vector<2x64xf32>
    %326 = arith.addf %325, %324 : vector<2x64xf32>
    %327 = arith.divf %325, %326 : vector<2x64xf32>
    %328 = vector.extract_strided_slice %318 {offsets = [0, 64], sizes = [2, 32], strides = [1, 1]} : vector<2x96xf32> to vector<2x32xf32>
    %329 = vector.extract_strided_slice %327 {offsets = [0, 0], sizes = [2, 32], strides = [1, 1]} : vector<2x64xf32> to vector<2x32xf32>
    %330 = vector.extract_strided_slice %319 {offsets = [0, 64], sizes = [2, 32], strides = [1, 1]} : vector<2x96xf32> to vector<2x32xf32>
    %331 = vector.broadcast %5 : vector<1x32xf32> to vector<2x32xf32>
    %332 = arith.addf %330, %331 : vector<2x32xf32>
    %333 = arith.mulf %329, %332 : vector<2x32xf32>
    %334 = arith.addf %328, %333 : vector<2x32xf32>
    %335 = math.tanh %334 : vector<2x32xf32>
    %336 = vector.extract_strided_slice %327 {offsets = [0, 32], sizes = [2, 32], strides = [1, 1]} : vector<2x64xf32> to vector<2x32xf32>
    %337 = arith.subf %315, %335 : vector<2x32xf32>
    %338 = arith.mulf %336, %337 : vector<2x32xf32>
    %339 = arith.addf %335, %338 : vector<2x32xf32>
    %c2_56 = arith.constant 2 : index
    %c0_57 = arith.constant 0 : index
    %340 = vector.load %arg6[%c2_56, %c0_57] : memref<16x41xf32, #tpu.memory_space<vmem>>, vector<2x32xf32>
    tpu.vector_store %arg6[%c2_56, %c0_57], %339 {strides = array<i32>} : memref<16x41xf32, #tpu.memory_space<vmem>>, vector<2x32xf32>,
    %341 = vector.extract_strided_slice %286 {offsets = [4, 0], sizes = [2, 96], strides = [1, 1]} : vector<16x96xf32> to vector<2x96xf32>
    %342 = arith.addf %341, %291 : vector<2x96xf32>
    %cst_58 = arith.constant dense<0.000000e+00> : vector<2x96xf32>
    %343 = tpu.matmul %339, %2, %cst_58 {dimension_numbers = #tpu.dot_dimension_numbers<[1], [0], [0], [1], [0, 0, 1, 1], [], []>} : vector<2x32xf32>, vector<32x96xf32>, vector<2x96xf32> -> vector<2x96xf32>
    %344 = vector.extract_strided_slice %342 {offsets = [0, 0], sizes = [2, 64], strides = [1, 1]} : vector<2x96xf32> to vector<2x64xf32>
    %345 = vector.extract_strided_slice %343 {offsets = [0, 0], sizes = [2, 64], strides = [1, 1]} : vector<2x96xf32> to vector<2x64xf32>
    %346 = arith.addf %344, %345 : vector<2x64xf32>
    %347 = arith.negf %346 : vector<2x64xf32>
    %348 = math.exp %347 : vector<2x64xf32>
    %cst_59 = arith.constant 1.000000e+00 : f32
    %349 = vector.broadcast %cst_59 : f32 to vector<2x64xf32>
    %350 = arith.addf %349, %348 : vector<2x64xf32>
    %351 = arith.divf %349, %350 : vector<2x64xf32>
    %352 = vector.extract_strided_slice %342 {offsets = [0, 64], sizes = [2, 32], strides = [1, 1]} : vector<2x96xf32> to vector<2x32xf32>
    %353 = vector.extract_strided_slice %351 {offsets = [0, 0], sizes = [2, 32], strides = [1, 1]} : vector<2x64xf32> to vector<2x32xf32>
    %354 = vector.extract_strided_slice %343 {offsets = [0, 64], sizes = [2, 32], strides = [1, 1]} : vector<2x96xf32> to vector<2x32xf32>
    %355 = vector.broadcast %5 : vector<1x32xf32> to vector<2x32xf32>
    %356 = arith.addf %354, %355 : vector<2x32xf32>
    %357 = arith.mulf %353, %356 : vector<2x32xf32>
    %358 = arith.addf %352, %357 : vector<2x32xf32>
    %359 = math.tanh %358 : vector<2x32xf32>
    %360 = vector.extract_strided_slice %351 {offsets = [0, 32], sizes = [2, 32], strides = [1, 1]} : vector<2x64xf32> to vector<2x32xf32>
    %361 = arith.subf %339, %359 : vector<2x32xf32>
    %362 = arith.mulf %360, %361 : vector<2x32xf32>
    %363 = arith.addf %359, %362 : vector<2x32xf32>
    %c4_60 = arith.constant 4 : index
    %c0_61 = arith.constant 0 : index
    %364 = vector.load %arg6[%c4_60, %c0_61] : memref<16x41xf32, #tpu.memory_space<vmem>>, vector<2x32xf32>
    tpu.vector_store %arg6[%c4_60, %c0_61], %363 {strides = array<i32>} : memref<16x41xf32, #tpu.memory_space<vmem>>, vector<2x32xf32>,
    %365 = vector.extract_strided_slice %286 {offsets = [6, 0], sizes = [2, 96], strides = [1, 1]} : vector<16x96xf32> to vector<2x96xf32>
    %366 = arith.addf %365, %291 : vector<2x96xf32>
    %cst_62 = arith.constant dense<0.000000e+00> : vector<2x96xf32>
    %367 = tpu.matmul %363, %2, %cst_62 {dimension_numbers = #tpu.dot_dimension_numbers<[1], [0], [0], [1], [0, 0, 1, 1], [], []>} : vector<2x32xf32>, vector<32x96xf32>, vector<2x96xf32> -> vector<2x96xf32>
    %368 = vector.extract_strided_slice %366 {offsets = [0, 0], sizes = [2, 64], strides = [1, 1]} : vector<2x96xf32> to vector<2x64xf32>
    %369 = vector.extract_strided_slice %367 {offsets = [0, 0], sizes = [2, 64], strides = [1, 1]} : vector<2x96xf32> to vector<2x64xf32>
    %370 = arith.addf %368, %369 : vector<2x64xf32>
    %371 = arith.negf %370 : vector<2x64xf32>
    %372 = math.exp %371 : vector<2x64xf32>
    %cst_63 = arith.constant 1.000000e+00 : f32
    %373 = vector.broadcast %cst_63 : f32 to vector<2x64xf32>
    %374 = arith.addf %373, %372 : vector<2x64xf32>
    %375 = arith.divf %373, %374 : vector<2x64xf32>
    %376 = vector.extract_strided_slice %366 {offsets = [0, 64], sizes = [2, 32], strides = [1, 1]} : vector<2x96xf32> to vector<2x32xf32>
    %377 = vector.extract_strided_slice %375 {offsets = [0, 0], sizes = [2, 32], strides = [1, 1]} : vector<2x64xf32> to vector<2x32xf32>
    %378 = vector.extract_strided_slice %367 {offsets = [0, 64], sizes = [2, 32], strides = [1, 1]} : vector<2x96xf32> to vector<2x32xf32>
    %379 = vector.broadcast %5 : vector<1x32xf32> to vector<2x32xf32>
    %380 = arith.addf %378, %379 : vector<2x32xf32>
    %381 = arith.mulf %377, %380 : vector<2x32xf32>
    %382 = arith.addf %376, %381 : vector<2x32xf32>
    %383 = math.tanh %382 : vector<2x32xf32>
    %384 = vector.extract_strided_slice %375 {offsets = [0, 32], sizes = [2, 32], strides = [1, 1]} : vector<2x64xf32> to vector<2x32xf32>
    %385 = arith.subf %363, %383 : vector<2x32xf32>
    %386 = arith.mulf %384, %385 : vector<2x32xf32>
    %387 = arith.addf %383, %386 : vector<2x32xf32>
    %c6 = arith.constant 6 : index
    %c0_64 = arith.constant 0 : index
    %388 = vector.load %arg6[%c6, %c0_64] : memref<16x41xf32, #tpu.memory_space<vmem>>, vector<2x32xf32>
    tpu.vector_store %arg6[%c6, %c0_64], %387 {strides = array<i32>} : memref<16x41xf32, #tpu.memory_space<vmem>>, vector<2x32xf32>,
    %389 = vector.extract_strided_slice %286 {offsets = [8, 0], sizes = [2, 96], strides = [1, 1]} : vector<16x96xf32> to vector<2x96xf32>
    %390 = arith.addf %389, %291 : vector<2x96xf32>
    %cst_65 = arith.constant dense<0.000000e+00> : vector<2x96xf32>
    %391 = tpu.matmul %387, %2, %cst_65 {dimension_numbers = #tpu.dot_dimension_numbers<[1], [0], [0], [1], [0, 0, 1, 1], [], []>} : vector<2x32xf32>, vector<32x96xf32>, vector<2x96xf32> -> vector<2x96xf32>
    %392 = vector.extract_strided_slice %390 {offsets = [0, 0], sizes = [2, 64], strides = [1, 1]} : vector<2x96xf32> to vector<2x64xf32>
    %393 = vector.extract_strided_slice %391 {offsets = [0, 0], sizes = [2, 64], strides = [1, 1]} : vector<2x96xf32> to vector<2x64xf32>
    %394 = arith.addf %392, %393 : vector<2x64xf32>
    %395 = arith.negf %394 : vector<2x64xf32>
    %396 = math.exp %395 : vector<2x64xf32>
    %cst_66 = arith.constant 1.000000e+00 : f32
    %397 = vector.broadcast %cst_66 : f32 to vector<2x64xf32>
    %398 = arith.addf %397, %396 : vector<2x64xf32>
    %399 = arith.divf %397, %398 : vector<2x64xf32>
    %400 = vector.extract_strided_slice %390 {offsets = [0, 64], sizes = [2, 32], strides = [1, 1]} : vector<2x96xf32> to vector<2x32xf32>
    %401 = vector.extract_strided_slice %399 {offsets = [0, 0], sizes = [2, 32], strides = [1, 1]} : vector<2x64xf32> to vector<2x32xf32>
    %402 = vector.extract_strided_slice %391 {offsets = [0, 64], sizes = [2, 32], strides = [1, 1]} : vector<2x96xf32> to vector<2x32xf32>
    %403 = vector.broadcast %5 : vector<1x32xf32> to vector<2x32xf32>
    %404 = arith.addf %402, %403 : vector<2x32xf32>
    %405 = arith.mulf %401, %404 : vector<2x32xf32>
    %406 = arith.addf %400, %405 : vector<2x32xf32>
    %407 = math.tanh %406 : vector<2x32xf32>
    %408 = vector.extract_strided_slice %399 {offsets = [0, 32], sizes = [2, 32], strides = [1, 1]} : vector<2x64xf32> to vector<2x32xf32>
    %409 = arith.subf %387, %407 : vector<2x32xf32>
    %410 = arith.mulf %408, %409 : vector<2x32xf32>
    %411 = arith.addf %407, %410 : vector<2x32xf32>
    %c8_67 = arith.constant 8 : index
    %c0_68 = arith.constant 0 : index
    %412 = vector.load %arg6[%c8_67, %c0_68] : memref<16x41xf32, #tpu.memory_space<vmem>>, vector<2x32xf32>
    tpu.vector_store %arg6[%c8_67, %c0_68], %411 {strides = array<i32>} : memref<16x41xf32, #tpu.memory_space<vmem>>, vector<2x32xf32>,
    %413 = vector.extract_strided_slice %286 {offsets = [10, 0], sizes = [2, 96], strides = [1, 1]} : vector<16x96xf32> to vector<2x96xf32>
    %414 = arith.addf %413, %291 : vector<2x96xf32>
    %cst_69 = arith.constant dense<0.000000e+00> : vector<2x96xf32>
    %415 = tpu.matmul %411, %2, %cst_69 {dimension_numbers = #tpu.dot_dimension_numbers<[1], [0], [0], [1], [0, 0, 1, 1], [], []>} : vector<2x32xf32>, vector<32x96xf32>, vector<2x96xf32> -> vector<2x96xf32>
    %416 = vector.extract_strided_slice %414 {offsets = [0, 0], sizes = [2, 64], strides = [1, 1]} : vector<2x96xf32> to vector<2x64xf32>
    %417 = vector.extract_strided_slice %415 {offsets = [0, 0], sizes = [2, 64], strides = [1, 1]} : vector<2x96xf32> to vector<2x64xf32>
    %418 = arith.addf %416, %417 : vector<2x64xf32>
    %419 = arith.negf %418 : vector<2x64xf32>
    %420 = math.exp %419 : vector<2x64xf32>
    %cst_70 = arith.constant 1.000000e+00 : f32
    %421 = vector.broadcast %cst_70 : f32 to vector<2x64xf32>
    %422 = arith.addf %421, %420 : vector<2x64xf32>
    %423 = arith.divf %421, %422 : vector<2x64xf32>
    %424 = vector.extract_strided_slice %414 {offsets = [0, 64], sizes = [2, 32], strides = [1, 1]} : vector<2x96xf32> to vector<2x32xf32>
    %425 = vector.extract_strided_slice %423 {offsets = [0, 0], sizes = [2, 32], strides = [1, 1]} : vector<2x64xf32> to vector<2x32xf32>
    %426 = vector.extract_strided_slice %415 {offsets = [0, 64], sizes = [2, 32], strides = [1, 1]} : vector<2x96xf32> to vector<2x32xf32>
    %427 = vector.broadcast %5 : vector<1x32xf32> to vector<2x32xf32>
    %428 = arith.addf %426, %427 : vector<2x32xf32>
    %429 = arith.mulf %425, %428 : vector<2x32xf32>
    %430 = arith.addf %424, %429 : vector<2x32xf32>
    %431 = math.tanh %430 : vector<2x32xf32>
    %432 = vector.extract_strided_slice %423 {offsets = [0, 32], sizes = [2, 32], strides = [1, 1]} : vector<2x64xf32> to vector<2x32xf32>
    %433 = arith.subf %411, %431 : vector<2x32xf32>
    %434 = arith.mulf %432, %433 : vector<2x32xf32>
    %435 = arith.addf %431, %434 : vector<2x32xf32>
    %c10 = arith.constant 10 : index
    %c0_71 = arith.constant 0 : index
    %436 = vector.load %arg6[%c10, %c0_71] : memref<16x41xf32, #tpu.memory_space<vmem>>, vector<2x32xf32>
    tpu.vector_store %arg6[%c10, %c0_71], %435 {strides = array<i32>} : memref<16x41xf32, #tpu.memory_space<vmem>>, vector<2x32xf32>,
    %437 = vector.extract_strided_slice %286 {offsets = [12, 0], sizes = [2, 96], strides = [1, 1]} : vector<16x96xf32> to vector<2x96xf32>
    %438 = arith.addf %437, %291 : vector<2x96xf32>
    %cst_72 = arith.constant dense<0.000000e+00> : vector<2x96xf32>
    %439 = tpu.matmul %435, %2, %cst_72 {dimension_numbers = #tpu.dot_dimension_numbers<[1], [0], [0], [1], [0, 0, 1, 1], [], []>} : vector<2x32xf32>, vector<32x96xf32>, vector<2x96xf32> -> vector<2x96xf32>
    %440 = vector.extract_strided_slice %438 {offsets = [0, 0], sizes = [2, 64], strides = [1, 1]} : vector<2x96xf32> to vector<2x64xf32>
    %441 = vector.extract_strided_slice %439 {offsets = [0, 0], sizes = [2, 64], strides = [1, 1]} : vector<2x96xf32> to vector<2x64xf32>
    %442 = arith.addf %440, %441 : vector<2x64xf32>
    %443 = arith.negf %442 : vector<2x64xf32>
    %444 = math.exp %443 : vector<2x64xf32>
    %cst_73 = arith.constant 1.000000e+00 : f32
    %445 = vector.broadcast %cst_73 : f32 to vector<2x64xf32>
    %446 = arith.addf %445, %444 : vector<2x64xf32>
    %447 = arith.divf %445, %446 : vector<2x64xf32>
    %448 = vector.extract_strided_slice %438 {offsets = [0, 64], sizes = [2, 32], strides = [1, 1]} : vector<2x96xf32> to vector<2x32xf32>
    %449 = vector.extract_strided_slice %447 {offsets = [0, 0], sizes = [2, 32], strides = [1, 1]} : vector<2x64xf32> to vector<2x32xf32>
    %450 = vector.extract_strided_slice %439 {offsets = [0, 64], sizes = [2, 32], strides = [1, 1]} : vector<2x96xf32> to vector<2x32xf32>
    %451 = vector.broadcast %5 : vector<1x32xf32> to vector<2x32xf32>
    %452 = arith.addf %450, %451 : vector<2x32xf32>
    %453 = arith.mulf %449, %452 : vector<2x32xf32>
    %454 = arith.addf %448, %453 : vector<2x32xf32>
    %455 = math.tanh %454 : vector<2x32xf32>
    %456 = vector.extract_strided_slice %447 {offsets = [0, 32], sizes = [2, 32], strides = [1, 1]} : vector<2x64xf32> to vector<2x32xf32>
    %457 = arith.subf %435, %455 : vector<2x32xf32>
    %458 = arith.mulf %456, %457 : vector<2x32xf32>
    %459 = arith.addf %455, %458 : vector<2x32xf32>
    %c12 = arith.constant 12 : index
    %c0_74 = arith.constant 0 : index
    %460 = vector.load %arg6[%c12, %c0_74] : memref<16x41xf32, #tpu.memory_space<vmem>>, vector<2x32xf32>
    tpu.vector_store %arg6[%c12, %c0_74], %459 {strides = array<i32>} : memref<16x41xf32, #tpu.memory_space<vmem>>, vector<2x32xf32>,
    %461 = vector.extract_strided_slice %286 {offsets = [14, 0], sizes = [2, 96], strides = [1, 1]} : vector<16x96xf32> to vector<2x96xf32>
    %462 = arith.addf %461, %291 : vector<2x96xf32>
    %cst_75 = arith.constant dense<0.000000e+00> : vector<2x96xf32>
    %463 = tpu.matmul %459, %2, %cst_75 {dimension_numbers = #tpu.dot_dimension_numbers<[1], [0], [0], [1], [0, 0, 1, 1], [], []>} : vector<2x32xf32>, vector<32x96xf32>, vector<2x96xf32> -> vector<2x96xf32>
    %464 = vector.extract_strided_slice %462 {offsets = [0, 0], sizes = [2, 64], strides = [1, 1]} : vector<2x96xf32> to vector<2x64xf32>
    %465 = vector.extract_strided_slice %463 {offsets = [0, 0], sizes = [2, 64], strides = [1, 1]} : vector<2x96xf32> to vector<2x64xf32>
    %466 = arith.addf %464, %465 : vector<2x64xf32>
    %467 = arith.negf %466 : vector<2x64xf32>
    %468 = math.exp %467 : vector<2x64xf32>
    %cst_76 = arith.constant 1.000000e+00 : f32
    %469 = vector.broadcast %cst_76 : f32 to vector<2x64xf32>
    %470 = arith.addf %469, %468 : vector<2x64xf32>
    %471 = arith.divf %469, %470 : vector<2x64xf32>
    %472 = vector.extract_strided_slice %462 {offsets = [0, 64], sizes = [2, 32], strides = [1, 1]} : vector<2x96xf32> to vector<2x32xf32>
    %473 = vector.extract_strided_slice %471 {offsets = [0, 0], sizes = [2, 32], strides = [1, 1]} : vector<2x64xf32> to vector<2x32xf32>
    %474 = vector.extract_strided_slice %463 {offsets = [0, 64], sizes = [2, 32], strides = [1, 1]} : vector<2x96xf32> to vector<2x32xf32>
    %475 = vector.broadcast %5 : vector<1x32xf32> to vector<2x32xf32>
    %476 = arith.addf %474, %475 : vector<2x32xf32>
    %477 = arith.mulf %473, %476 : vector<2x32xf32>
    %478 = arith.addf %472, %477 : vector<2x32xf32>
    %479 = math.tanh %478 : vector<2x32xf32>
    %480 = vector.extract_strided_slice %471 {offsets = [0, 32], sizes = [2, 32], strides = [1, 1]} : vector<2x64xf32> to vector<2x32xf32>
    %481 = arith.subf %459, %479 : vector<2x32xf32>
    %482 = arith.mulf %480, %481 : vector<2x32xf32>
    %483 = arith.addf %479, %482 : vector<2x32xf32>
    %c14 = arith.constant 14 : index
    %c0_77 = arith.constant 0 : index
    %484 = vector.load %arg6[%c14, %c0_77] : memref<16x41xf32, #tpu.memory_space<vmem>>, vector<2x32xf32>
    tpu.vector_store %arg6[%c14, %c0_77], %483 {strides = array<i32>} : memref<16x41xf32, #tpu.memory_space<vmem>>, vector<2x32xf32>,
    %c0_78 = arith.constant 0 : index
    %c0_79 = arith.constant 0 : index
    %485 = vector.load %arg6[%c0_78, %c0_79] : memref<16x41xf32, #tpu.memory_space<vmem>>, vector<16x32xf32>
    %c0_80 = arith.constant 0 : index
    %c640 = arith.constant 640 : index
    %486 = vector.load %arg3[%c0_80, %c640] : memref<32x1024xf32, #tpu.memory_space<vmem>>, vector<32x32xf32>
    %cst_81 = arith.constant dense<0.000000e+00> : vector<16x32xf32>
    %487 = tpu.matmul %485, %486, %cst_81 {dimension_numbers = #tpu.dot_dimension_numbers<[1], [0], [0], [1], [0, 0, 1, 1], [], []>} : vector<16x32xf32>, vector<32x32xf32>, vector<16x32xf32> -> vector<16x32xf32>
    %c6_82 = arith.constant 6 : index
    %c0_83 = arith.constant 0 : index
    %488 = vector.load %arg5[%c6_82, %c0_83] : memref<16x128xf32, #tpu.memory_space<vmem>>, vector<1x32xf32>
    %489 = vector.broadcast %488 : vector<1x32xf32> to vector<16x32xf32>
    %490 = arith.addf %487, %489 : vector<16x32xf32>
    %cst_84 = arith.constant 0.000000e+00 : f32
    %491 = vector.broadcast %cst_84 : f32 to vector<16x32xf32>
    %492 = arith.maximumf %490, %491 : vector<16x32xf32>
    %c0_85 = arith.constant 0 : index
    %c768 = arith.constant 768 : index
    %493 = vector.load %arg3[%c0_85, %c768] : memref<32x1024xf32, #tpu.memory_space<vmem>>, vector<32x32xf32>
    %cst_86 = arith.constant dense<0.000000e+00> : vector<16x32xf32>
    %494 = tpu.matmul %492, %493, %cst_86 {dimension_numbers = #tpu.dot_dimension_numbers<[1], [0], [0], [1], [0, 0, 1, 1], [], []>} : vector<16x32xf32>, vector<32x32xf32>, vector<16x32xf32> -> vector<16x32xf32>
    %c7 = arith.constant 7 : index
    %c0_87 = arith.constant 0 : index
    %495 = vector.load %arg5[%c7, %c0_87] : memref<16x128xf32, #tpu.memory_space<vmem>>, vector<1x32xf32>
    %496 = vector.broadcast %495 : vector<1x32xf32> to vector<16x32xf32>
    %497 = arith.addf %494, %496 : vector<16x32xf32>
    %cst_88 = arith.constant 0.000000e+00 : f32
    %498 = vector.broadcast %cst_88 : f32 to vector<16x32xf32>
    %499 = arith.maximumf %497, %498 : vector<16x32xf32>
    %c0_89 = arith.constant 0 : index
    %c896 = arith.constant 896 : index
    %500 = vector.load %arg3[%c0_89, %c896] : memref<32x1024xf32, #tpu.memory_space<vmem>>, vector<32x9xf32>
    %cst_90 = arith.constant dense<0.000000e+00> : vector<16x9xf32>
    %501 = tpu.matmul %499, %500, %cst_90 {dimension_numbers = #tpu.dot_dimension_numbers<[1], [0], [0], [1], [0, 0, 1, 1], [], []>} : vector<16x32xf32>, vector<32x9xf32>, vector<16x9xf32> -> vector<16x9xf32>
    %c8_91 = arith.constant 8 : index
    %c0_92 = arith.constant 0 : index
    %502 = vector.load %arg5[%c8_91, %c0_92] : memref<16x128xf32, #tpu.memory_space<vmem>>, vector<1x9xf32>
    %503 = vector.broadcast %502 : vector<1x9xf32> to vector<16x9xf32>
    %504 = arith.addf %501, %503 : vector<16x9xf32>
    %c0_93 = arith.constant 0 : index
    %c32 = arith.constant 32 : index
    %505 = vector.load %arg6[%c0_93, %c32] : memref<16x41xf32, #tpu.memory_space<vmem>>, vector<16x9xf32>
    tpu.vector_store %arg6[%c0_93, %c32], %504 {strides = array<i32>} : memref<16x41xf32, #tpu.memory_space<vmem>>, vector<16x9xf32>,
    return
  }
}

</mosaic_0001>

<llo_original>
// kernel: recurrence_forward.1
$region0: #{recurrence_forward.1}
  #allocation0 [shape = 'u32[]', space=smem, size = 0x4, offset = 0x4, fixed_abs, tag = 'smem constant byte address 0x4 - core index']
  #allocation1 [shape = 'u32[72,128]{1,0:T(1,128)}', space=vmem, size = 0x9000, scoped, tag = 'internal scratch']
  %s0 = inlined_call_operand.vmem [shape: f32[12,32], index: 0, kind: input, shape index: {}]
  %s1 = inlined_call_operand.vmem [shape: f32[16,8], index: 1, kind: input, shape index: {}]
  %s2 = inlined_call_operand.vmem [shape: f32[2,32], index: 2, kind: input, shape index: {}]
  %s3 = inlined_call_operand.vmem [shape: f32[32,1024], index: 3, kind: input, shape index: {}]
  %s4 = inlined_call_operand.hbm [shape: f32[72,96], index: 4, kind: input, shape index: {}]
  %s5 = inlined_call_operand.vmem [shape: f32[16,128], index: 5, kind: input, shape index: {}]
  %s6 = inlined_call_operand.vmem [shape: f32[16,41], index: 6, kind: output, shape index: {}]
  %s7 = sld [smem:[#allocation0]]
  $region38: #{recurrence_forward.1} parent=0
    _
  %s9 = ssub.s32 1, %s7
  %s10 = scalar_select 0, %s9, %s7
  $region1: #{recurrence_forward.1} parent=0
    #allocation2 [shape = 'u8[36864]{0}', space=vmem, size = 0x9000, scoped, tag = 'input window, operand 4, single buffered']
    #allocation3 [shape = 's32[1]{0}', space=sflag, size = 0x4, scoped, tag = 'scoped memory for recurrence_forward.1']
    %11 = vsyncpa [#allocation3], 0
    // Predicated region
    $region2: #{recurrence_forward.1} parent=1 // pred_check
      _
    $region3: #{recurrence_forward.1} parent=1 // pred_check_branch
      %13 = sbr.rel (0) target = $region5
    $region4: #{recurrence_forward.1} parent=1 // pred_region
      _
    $region5: #{recurrence_forward.1} parent=1 // pred_fallthru
      _
    // Predicated region
    $region6: #{recurrence_forward.1} parent=1 // pred_check
      _
    $region7: #{recurrence_forward.1} parent=1 // pred_check_branch
      %15 = sbr.rel (0) target = $region9
    $region8: #{recurrence_forward.1} parent=1 // pred_region
      _
    $region9: #{recurrence_forward.1} parent=1 // pred_fallthru
      _
    // Predicated region
    $region10: #{recurrence_forward.1} parent=1 // pred_check
      _
    $region11: #{recurrence_forward.1} parent=1 // pred_check_branch
      %17 = sbr.rel (0) target = $region13
    $region12: #{recurrence_forward.1} parent=1 // pred_region
      _
    $region13: #{recurrence_forward.1} parent=1 // pred_fallthru
      _
    // Predicated region
    $region14: #{recurrence_forward.1} parent=1 // pred_check
      _
    $region15: #{recurrence_forward.1} parent=1 // pred_check_branch
      %19 = sbr.rel (0) target = $region17
    $region16: #{recurrence_forward.1} parent=1 // pred_region
      _
    $region17: #{recurrence_forward.1} parent=1 // pred_fallthru
      _
    // Predicated region
    $region18: #{recurrence_forward.1} parent=1 // pred_check
      _
    $region19: #{recurrence_forward.1} parent=1 // pred_check_branch
      %21 = sbr.rel (0) target = $region21
    $region20: #{recurrence_forward.1} parent=1 // pred_region
      %23 = vsyncadd [#allocation3], 0
      %s24 = sshll.u32 %s4, 4
      %s25 = int_to_ptr.hbm [resolvable:$true] %s24
      %s26 = sshll.u32 [#allocation2], 4
      %s27 = int_to_ptr.vmem [resolvable:$true] %s26
      %32 = dma.hbm_to_vmem [thread:$0]  %s25, 1152, %s27, [#allocation3], 128, 128, 8
    $region21: #{recurrence_forward.1} parent=1 // pred_fallthru
      _
    // Predicated region
    $region22: #{recurrence_forward.1} parent=1 // pred_check
      _
    $region23: #{recurrence_forward.1} parent=1 // pred_check_branch
      %34 = sbr.rel (0) target = $region25
    $region24: #{recurrence_forward.1} parent=1 // pred_region
      _
    $region25: #{recurrence_forward.1} parent=1 // pred_fallthru
      _
    // Predicated region
    $region26: #{recurrence_forward.1} parent=1 // pred_check
      _
    $region27: #{recurrence_forward.1} parent=1 // pred_check_branch
      %36 = sbr.rel (0) target = $region29
    $region28: #{recurrence_forward.1} parent=1 // pred_region
      %38 = dma.done [#allocation3], 1152
    $region29: #{recurrence_forward.1} parent=1 // pred_fallthru
      _
    %v39 = vld [vmem:[%s3 + $0x10] sm:$0xff]
    %v40 = vld [vmem:[%s3 + $0x50] sm:$0xff]
    %v41 = vld [vmem:[%s3 + $0x90] sm:$0xff]
    %v42 = vld [vmem:[%s3 + $0xd0] sm:$0xff]
    %v43 = vld [vmem:[%s3 + $0x18] sm:$0xff]
    %v44 = vld [vmem:[%s3 + $0x58] sm:$0xff]
    %v45 = vld [vmem:[%s3 + $0x98] sm:$0xff]
    %v46 = vld [vmem:[%s3 + $0xd8] sm:$0xff]
    %v47 = vld [vmem:[%s3 + $0x20] sm:$0xff]
    %v48 = vld [vmem:[%s3 + $0x60] sm:$0xff]
    %v49 = vld [vmem:[%s3 + $0xa0] sm:$0xff]
    %v50 = vld [vmem:[%s3 + $0xe0] sm:$0xff]
    %v51 = vld [vmem:[%s5 + $0x2] sm:$0x1]
    %v52 = vld [vmem:[%s5 + $0x3] sm:$0x1]
    %v53 = vld [vmem:[%s5 + $0x5] sm:$0x1]
    %v54 = vld [vmem:[%s0] sm:$0xff]
    %v55 = vld [vmem:[%s0 + $0x8] sm:$0xf]
    %v56 = vld [vmem:[%s3] sm:$0xff]
    %v57 = vld [vmem:[%s3 + $0x40] sm:$0xff]
    %v58 = vld [vmem:[%s3 + $0x80] sm:$0xff]
    %v59 = vld [vmem:[%s3 + $0xc0] sm:$0xff]
    %v60 = vld [vmem:[%s5] sm:$0x1]
    %v61 = vperm.slane %v60, 0
    %vm62 = vcmask 261120
    %v64 = vsel %vm62, %v54, 0
    %v67 = vsel %vm62, %v55, 0
    %69 = vmatpush.msra.mxu0 0.0
    %70 = vmatpush.msra.mxu0 0.0
    %71 = vmatpush.msra.mxu0 0.0
    %72 = vmatpush.msra.mxu0 0.0
    %73 = vmatpush.msra.mxu0 0.0
    %74 = vmatpush.msra.mxu0 0.0
    %75 = vmatpush.msra.mxu0 0.0
    %76 = vmatpush.msra.mxu0 0.0
    %77 = vmatpush.msra.mxu0 0.0
    %78 = vmatpush.msra.mxu0 0.0
    %79 = vmatpush.msra.mxu0 0.0
    %80 = vmatpush.msra.mxu0 0.0
    %81 = vmatpush.msra.mxu0 %v59
    %82 = vmatpush.msra.mxu0 %v58
    %83 = vmatpush.msra.mxu0 %v57
    %84 = vmatpush.msra.mxu0 %v56
    %85 = vmatmul.f32.gmra.mxu0 %v64
    %v86 = vpop.f32.mrf.mxu0
    %v87 = vadd.f32 %v61, %v86
    %88 = vmatmul.f32.gmra.mxu0 %v67
    %v89 = vpop.f32.mrf.mxu0
    %v90 = vadd.f32 %v61, %v89
    %91 = vdwg.mxu0
    %v92 = vld [vmem:[%s3 + $0x8] sm:$0xff]
    %v93 = vld [vmem:[%s3 + $0x48] sm:$0xff]
    %v94 = vld [vmem:[%s3 + $0x88] sm:$0xff]
    %v95 = vld [vmem:[%s3 + $0xc8] sm:$0xff]
    %v96 = vld [vmem:[%s5 + $0x1] sm:$0x1]
    %v97 = vperm.slane %v96, 0
    %98 = vmatpush.msra.mxu0 0.0
    %99 = vmatpush.msra.mxu0 0.0
    %100 = vmatpush.msra.mxu0 0.0
    %101 = vmatpush.msra.mxu0 0.0
    %102 = vmatpush.msra.mxu0 0.0
    %103 = vmatpush.msra.mxu0 0.0
    %104 = vmatpush.msra.mxu0 0.0
    %105 = vmatpush.msra.mxu0 0.0
    %106 = vmatpush.msra.mxu0 0.0
    %107 = vmatpush.msra.mxu0 0.0
    %108 = vmatpush.msra.mxu0 0.0
    %109 = vmatpush.msra.mxu0 0.0
    %110 = vmatpush.msra.mxu0 %v95
    %111 = vmatpush.msra.mxu0 %v94
    %112 = vmatpush.msra.mxu0 %v93
    %113 = vmatpush.msra.mxu0 %v92
    %114 = vmatmul.f32.gmra.mxu0 %v64
    %v115 = vpop.f32.mrf.mxu0
    %v116 = vadd.f32 %v97, %v115
    %117 = vmatmul.f32.gmra.mxu0 %v67
    %v118 = vpop.f32.mrf.mxu0
    %v119 = vadd.f32 %v97, %v118
    %120 = vdwg.mxu0
    %v122 = vsel %vm62, 0.0, 0
    %124 = vmatpush.msra.mxu0 0.0
    %125 = vmatpush.msra.mxu0 0.0
    %126 = vmatpush.msra.mxu0 0.0
    %127 = vmatpush.msra.mxu0 0.0
    %128 = vmatpush.msra.mxu0 0.0
    %129 = vmatpush.msra.mxu0 0.0
    %130 = vmatpush.msra.mxu0 0.0
    %131 = vmatpush.msra.mxu0 0.0
    %132 = vmatpush.msra.mxu0 0.0
    %133 = vmatpush.msra.mxu0 0.0
    %134 = vmatpush.msra.mxu0 0.0
    %135 = vmatpush.msra.mxu0 0.0
    %136 = vmatpush.msra.mxu0 %v42
    %137 = vmatpush.msra.mxu0 %v41
    %138 = vmatpush.msra.mxu0 %v40
    %139 = vmatpush.msra.mxu0 %v39
    %140 = vmatmul.f32.gmra.mxu0 %v122
    %v141 = vpop.f32.mrf.mxu0
    %v142 = vadd.f32 0.0, %v141
    %143 = vdwg.mxu0
    %144 = vmatpush.msra.mxu0 0.0
    %145 = vmatpush.msra.mxu0 0.0
    %146 = vmatpush.msra.mxu0 0.0
    %147 = vmatpush.msra.mxu0 0.0
    %148 = vmatpush.msra.mxu0 0.0
    %149 = vmatpush.msra.mxu0 0.0
    %150 = vmatpush.msra.mxu0 0.0
    %151 = vmatpush.msra.mxu0 0.0
    %152 = vmatpush.msra.mxu0 0.0
    %153 = vmatpush.msra.mxu0 0.0
    %154 = vmatpush.msra.mxu0 0.0
    %155 = vmatpush.msra.mxu0 0.0
    %156 = vmatpush.msra.mxu0 %v46
    %157 = vmatpush.msra.mxu0 %v45
    %158 = vmatpush.msra.mxu0 %v44
    %159 = vmatpush.msra.mxu0 %v43
    %160 = vmatmul.f32.gmra.mxu0 %v122
    %v161 = vpop.f32.mrf.mxu0
    %v162 = vadd.f32 0.0, %v161
    %163 = vdwg.mxu0
    %v164 = vadd.f32 %v87, %v142
    %v165 = vxor.u32 %v164, 2147483648
    %v166 = vmul.f32 %v165, 1.442695
    %v167 = vpow.pop %v166
    %v168 = vadd.f32 %v167, 1.0
    %v169 = vrcp.pop %v168
    %v170 = vmul.f32 %v168, %v169
    %v171 = vsub.f32 1.0, %v170
    %v172 = vmul.f32 %v169, %v171
    %v173 = vadd.f32 %v169, %v172
    %vm174 = vweird.f32 %v168
    %vm175 = vweird.f32 %v169
    %vm176 = vmor %vm174, %vm175
    %v177 = vsel %vm176, %v169, %v173
    %v178 = vand.u32 2147483647, %v168
    %vm179 = vcmp.eq.f32.partialorder %v178, 8.507059e+37
    %v180 = vand.u32 %v168, 2147483648
    %v181 = vor.u32 1.1754944e-38, %v180
    %v182 = vsel %vm179, %v181, %v177
    %v183 = vmul.f32 1.0, %v182
    %v184 = vperm.slane %v51, 0
    %186 = vrot.lane.b32.xlu0 %v184, 64
    %v187 = vpop.permute.xlu0 %186
    %v189 = vadd.f32 %v142, %v187
    %191 = vrot.lane.b32.xlu0 %v189, 64
    %v192 = vpop.permute.xlu0 %191
    %v194 = vmul.f32 %v183, %v192
    %196 = vrot.lane.b32.xlu0 %v194, 64
    %v197 = vpop.permute.xlu0 %196
    %v199 = vadd.f32 %v87, %v197
    %v200 = vtanh.pop %v199
    %v201 = vsub.f32 0.0, %v200
    %203 = vrot.lane.b32.xlu0 %v201, 96
    %v204 = vpop.permute.xlu0 %203
    %v206 = vmul.f32 %v183, %v204
    %208 = vrot.lane.b32.xlu0 %v206, 32
    %v209 = vpop.permute.xlu0 %208
    %v211 = vadd.f32 %v200, %v209
    %v213 = vrot.slane %v162, 6
    %v215 = vadd.f32 %v119, %v213
    %v216 = vxor.u32 %v215, 2147483648
    %v217 = vmul.f32 %v216, 1.442695
    %v218 = vpow.pop %v217
    %v219 = vadd.f32 %v218, 1.0
    %v220 = vrcp.pop %v219
    %v221 = vmul.f32 %v219, %v220
    %v222 = vsub.f32 1.0, %v221
    %v223 = vmul.f32 %v220, %v222
    %v224 = vadd.f32 %v220, %v223
    %vm225 = vweird.f32 %v219
    %vm226 = vweird.f32 %v220
    %vm227 = vmor %vm225, %vm226
    %v228 = vsel %vm227, %v220, %v224
    %v229 = vand.u32 2147483647, %v219
    %vm230 = vcmp.eq.f32.partialorder %v229, 8.507059e+37
    %v231 = vand.u32 %v219, 2147483648
    %v232 = vor.u32 1.1754944e-38, %v231
    %v233 = vsel %vm230, %v232, %v228
    %v234 = vmul.f32 1.0, %v233
    %v235 = vperm.slane %v52, 0
    %237 = vrot.lane.b32.xlu0 %v235, 64
    %v238 = vpop.permute.xlu0 %237
    %v240 = vadd.f32 %v162, %v238
    %v242 = vrot.slane %v240, 6
    %243 = vrot.lane.b32.xlu0 %v242, 64
    %v244 = vpop.permute.xlu0 %243
    %v246 = vmul.f32 %v234, %v244
    %248 = vrot.lane.b32.xlu0 %v246, 64
    %v249 = vpop.permute.xlu0 %248
    %v251 = vadd.f32 %v119, %v249
    %v252 = vtanh.pop %v251
    %v253 = vsub.f32 0.0, %v252
    %255 = vrot.lane.b32.xlu0 %v253, 96
    %v256 = vpop.permute.xlu0 %255
    %v258 = vmul.f32 %v234, %v256
    %260 = vrot.lane.b32.xlu0 %v258, 32
    %v261 = vpop.permute.xlu0 %260
    %v263 = vadd.f32 %v252, %v261
    %265 = vrot.lane.b32.xlu0 %v211, 64
    %v266 = vpop.permute.xlu0 %265
    %v267 = vsel %vm62, %v266, 0
    %269 = vmatpush.msra.mxu0 0.0
    %270 = vmatpush.msra.mxu0 0.0
    %271 = vmatpush.msra.mxu0 0.0
    %272 = vmatpush.msra.mxu0 0.0
    %273 = vmatpush.msra.mxu0 0.0
    %274 = vmatpush.msra.mxu0 0.0
    %275 = vmatpush.msra.mxu0 0.0
    %276 = vmatpush.msra.mxu0 0.0
    %277 = vmatpush.msra.mxu0 0.0
    %278 = vmatpush.msra.mxu0 0.0
    %279 = vmatpush.msra.mxu0 0.0
    %280 = vmatpush.msra.mxu0 0.0
    %281 = vmatpush.msra.mxu0 %v42
    %282 = vmatpush.msra.mxu0 %v41
    %283 = vmatpush.msra.mxu0 %v40
    %284 = vmatpush.msra.mxu0 %v39
    %285 = vmatmul.f32.gmra.mxu0 %v267
    %v286 = vpop.f32.mrf.mxu0
    %v287 = vadd.f32 0.0, %v286
    %288 = vdwg.mxu0
    %v290 = vrot.slane %v263, 2
    %291 = vrot.lane.b32.xlu0 %v290, 64
    %v292 = vpop.permute.xlu0 %291
    %v293 = vsel %vm62, %v292, 0
    %295 = vmatpush.msra.mxu0 0.0
    %296 = vmatpush.msra.mxu0 0.0
    %297 = vmatpush.msra.mxu0 0.0
    %298 = vmatpush.msra.mxu0 0.0
    %299 = vmatpush.msra.mxu0 0.0
    %300 = vmatpush.msra.mxu0 0.0
    %301 = vmatpush.msra.mxu0 0.0
    %302 = vmatpush.msra.mxu0 0.0
    %303 = vmatpush.msra.mxu0 0.0
    %304 = vmatpush.msra.mxu0 0.0
    %305 = vmatpush.msra.mxu0 0.0
    %306 = vmatpush.msra.mxu0 0.0
    %307 = vmatpush.msra.mxu0 %v46
    %308 = vmatpush.msra.mxu0 %v45
    %309 = vmatpush.msra.mxu0 %v44
    %310 = vmatpush.msra.mxu0 %v43
    %311 = vmatmul.f32.gmra.mxu0 %v293
    %v312 = vpop.f32.mrf.mxu0
    %v313 = vadd.f32 0.0, %v312
    %314 = vdwg.mxu0
    %v316 = vrot.slane %v287, 6
    %v318 = vadd.f32 %v87, %v316
    %v319 = vxor.u32 %v318, 2147483648
    %v320 = vmul.f32 %v319, 1.442695
    %v321 = vpow.pop %v320
    %v322 = vadd.f32 %v321, 1.0
    %v323 = vrcp.pop %v322
    %v324 = vmul.f32 %v322, %v323
    %v325 = vsub.f32 1.0, %v324
    %v326 = vmul.f32 %v323, %v325
    %v327 = vadd.f32 %v323, %v326
    %vm328 = vweird.f32 %v322
    %vm329 = vweird.f32 %v323
    %vm330 = vmor %vm328, %vm329
    %v331 = vsel %vm330, %v323, %v327
    %v332 = vand.u32 2147483647, %v322
    %vm333 = vcmp.eq.f32.partialorder %v332, 8.507059e+37
    %v334 = vand.u32 %v322, 2147483648
    %v335 = vor.u32 1.1754944e-38, %v334
    %v336 = vsel %vm333, %v335, %v331
    %v337 = vmul.f32 1.0, %v336
    %v338 = vadd.f32 %v287, %v187
    %v340 = vrot.slane %v338, 6
    %341 = vrot.lane.b32.xlu0 %v340, 64
    %v342 = vpop.permute.xlu0 %341
    %v344 = vmul.f32 %v337, %v342
    %346 = vrot.lane.b32.xlu0 %v344, 64
    %v347 = vpop.permute.xlu0 %346
    %v349 = vadd.f32 %v87, %v347
    %v350 = vtanh.pop %v349
    %v352 = vrot.slane %v350, 2
    %v354 = vsub.f32 %v211, %v352
    %v356 = vrot.slane %v354, 6
    %357 = vrot.lane.b32.xlu0 %v356, 96
    %v358 = vpop.permute.xlu0 %357
    %v360 = vmul.f32 %v337, %v358
    %362 = vrot.lane.b32.xlu0 %v360, 32
    %v363 = vpop.permute.xlu0 %362
    %v365 = vadd.f32 %v350, %v363
    %v366 = vadd.f32 %v119, %v313
    %v367 = vxor.u32 %v366, 2147483648
    %v368 = vmul.f32 %v367, 1.442695
    %v369 = vpow.pop %v368
    %v370 = vadd.f32 %v369, 1.0
    %v371 = vrcp.pop %v370
    %v372 = vmul.f32 %v370, %v371
    %v373 = vsub.f32 1.0, %v372
    %v374 = vmul.f32 %v371, %v373
    %v375 = vadd.f32 %v371, %v374
    %vm376 = vweird.f32 %v370
    %vm377 = vweird.f32 %v371
    %vm378 = vmor %vm376, %vm377
    %v379 = vsel %vm378, %v371, %v375
    %v380 = vand.u32 2147483647, %v370
    %vm381 = vcmp.eq.f32.partialorder %v380, 8.507059e+37
    %v382 = vand.u32 %v370, 2147483648
    %v383 = vor.u32 1.1754944e-38, %v382
    %v384 = vsel %vm381, %v383, %v379
    %v385 = vmul.f32 1.0, %v384
    %v386 = vadd.f32 %v313, %v238
    %388 = vrot.lane.b32.xlu0 %v386, 64
    %v389 = vpop.permute.xlu0 %388
    %v391 = vmul.f32 %v385, %v389
    %393 = vrot.lane.b32.xlu0 %v391, 64
    %v394 = vpop.permute.xlu0 %393
    %v396 = vadd.f32 %v119, %v394
    %v397 = vtanh.pop %v396
    %v399 = vrot.slane %v397, 6
    %v401 = vsub.f32 %v263, %v399
    %v403 = vrot.slane %v401, 2
    %404 = vrot.lane.b32.xlu0 %v403, 96
    %v405 = vpop.permute.xlu0 %404
    %v407 = vmul.f32 %v385, %v405
    %409 = vrot.lane.b32.xlu0 %v407, 32
    %v410 = vpop.permute.xlu0 %409
    %v412 = vadd.f32 %v397, %v410
    %v414 = vrot.slane %v365, 2
    %415 = vrot.lane.b32.xlu0 %v414, 64
    %v416 = vpop.permute.xlu0 %415
    %v417 = vsel %vm62, %v416, 0
    %419 = vmatpush.msra.mxu0 0.0
    %420 = vmatpush.msra.mxu0 0.0
    %421 = vmatpush.msra.mxu0 0.0
    %422 = vmatpush.msra.mxu0 0.0
    %423 = vmatpush.msra.mxu0 0.0
    %424 = vmatpush.msra.mxu0 0.0
    %425 = vmatpush.msra.mxu0 0.0
    %426 = vmatpush.msra.mxu0 0.0
    %427 = vmatpush.msra.mxu0 0.0
    %428 = vmatpush.msra.mxu0 0.0
    %429 = vmatpush.msra.mxu0 0.0
    %430 = vmatpush.msra.mxu0 0.0
    %431 = vmatpush.msra.mxu0 %v42
    %432 = vmatpush.msra.mxu0 %v41
    %433 = vmatpush.msra.mxu0 %v40
    %434 = vmatpush.msra.mxu0 %v39
    %435 = vmatmul.f32.gmra.mxu0 %v417
    %v436 = vpop.f32.mrf.mxu0
    %v437 = vadd.f32 0.0, %v436
    %438 = vdwg.mxu0
    %440 = vrot.lane.b32.xlu0 %v412, 64
    %v441 = vpop.permute.xlu0 %440
    %v442 = vsel %vm62, %v441, 0
    %444 = vmatpush.msra.mxu0 0.0
    %445 = vmatpush.msra.mxu0 0.0
    %446 = vmatpush.msra.mxu0 0.0
    %447 = vmatpush.msra.mxu0 0.0
    %448 = vmatpush.msra.mxu0 0.0
    %449 = vmatpush.msra.mxu0 0.0
    %450 = vmatpush.msra.mxu0 0.0
    %451 = vmatpush.msra.mxu0 0.0
    %452 = vmatpush.msra.mxu0 0.0
    %453 = vmatpush.msra.mxu0 0.0
    %454 = vmatpush.msra.mxu0 0.0
    %455 = vmatpush.msra.mxu0 0.0
    %456 = vmatpush.msra.mxu0 %v46
    %457 = vmatpush.msra.mxu0 %v45
    %458 = vmatpush.msra.mxu0 %v44
    %459 = vmatpush.msra.mxu0 %v43
    %460 = vmatmul.f32.gmra.mxu0 %v442
    %v461 = vpop.f32.mrf.mxu0
    %v462 = vadd.f32 0.0, %v461
    %463 = vdwg.mxu0
    %v465 = vrot.slane %v437, 4
    %v467 = vadd.f32 %v87, %v465
    %v468 = vxor.u32 %v467, 2147483648
    %v469 = vmul.f32 %v468, 1.442695
    %v470 = vpow.pop %v469
    %v471 = vadd.f32 %v470, 1.0
    %v472 = vrcp.pop %v471
    %v473 = vmul.f32 %v471, %v472
    %v474 = vsub.f32 1.0, %v473
    %v475 = vmul.f32 %v472, %v474
    %v476 = vadd.f32 %v472, %v475
    %vm477 = vweird.f32 %v471
    %vm478 = vweird.f32 %v472
    %vm479 = vmor %vm477, %vm478
    %v480 = vsel %vm479, %v472, %v476
    %v481 = vand.u32 2147483647, %v471
    %vm482 = vcmp.eq.f32.partialorder %v481, 8.507059e+37
    %v483 = vand.u32 %v471, 2147483648
    %v484 = vor.u32 1.1754944e-38, %v483
    %v485 = vsel %vm482, %v484, %v480
    %v486 = vmul.f32 1.0, %v485
    %v487 = vadd.f32 %v437, %v187
    %v489 = vrot.slane %v487, 4
    %490 = vrot.lane.b32.xlu0 %v489, 64
    %v491 = vpop.permute.xlu0 %490
    %v493 = vmul.f32 %v486, %v491
    %495 = vrot.lane.b32.xlu0 %v493, 64
    %v496 = vpop.permute.xlu0 %495
    %v498 = vadd.f32 %v87, %v496
    %v499 = vtanh.pop %v498
    %v501 = vrot.slane %v499, 2
    %v503 = vsub.f32 %v365, %v501
    %v505 = vrot.slane %v503, 6
    %506 = vrot.lane.b32.xlu0 %v505, 96
    %v507 = vpop.permute.xlu0 %506
    %v509 = vmul.f32 %v486, %v507
    %511 = vrot.lane.b32.xlu0 %v509, 32
    %v512 = vpop.permute.xlu0 %511
    %v514 = vadd.f32 %v499, %v512
    %v516 = vrot.slane %v462, 2
    %v518 = vadd.f32 %v116, %v516
    %v519 = vxor.u32 %v518, 2147483648
    %v520 = vmul.f32 %v519, 1.442695
    %v521 = vpow.pop %v520
    %v522 = vadd.f32 %v521, 1.0
    %v523 = vrcp.pop %v522
    %v524 = vmul.f32 %v522, %v523
    %v525 = vsub.f32 1.0, %v524
    %v526 = vmul.f32 %v523, %v525
    %v527 = vadd.f32 %v523, %v526
    %vm528 = vweird.f32 %v522
    %vm529 = vweird.f32 %v523
    %vm530 = vmor %vm528, %vm529
    %v531 = vsel %vm530, %v523, %v527
    %v532 = vand.u32 2147483647, %v522
    %vm533 = vcmp.eq.f32.partialorder %v532, 8.507059e+37
    %v534 = vand.u32 %v522, 2147483648
    %v535 = vor.u32 1.1754944e-38, %v534
    %v536 = vsel %vm533, %v535, %v531
    %v537 = vmul.f32 1.0, %v536
    %v538 = vadd.f32 %v462, %v238
    %v540 = vrot.slane %v538, 2
    %541 = vrot.lane.b32.xlu0 %v540, 64
    %v542 = vpop.permute.xlu0 %541
    %v544 = vmul.f32 %v537, %v542
    %546 = vrot.lane.b32.xlu0 %v544, 64
    %v547 = vpop.permute.xlu0 %546
    %v549 = vadd.f32 %v116, %v547
    %v550 = vtanh.pop %v549
    %v552 = vrot.slane %v550, 6
    %v554 = vsub.f32 %v412, %v552
    %v556 = vrot.slane %v554, 2
    %557 = vrot.lane.b32.xlu0 %v556, 96
    %v558 = vpop.permute.xlu0 %557
    %v560 = vmul.f32 %v537, %v558
    %562 = vrot.lane.b32.xlu0 %v560, 32
    %v563 = vpop.permute.xlu0 %562
    %v565 = vadd.f32 %v550, %v563
    %v567 = vrot.slane %v514, 4
    %568 = vrot.lane.b32.xlu0 %v567, 64
    %v569 = vpop.permute.xlu0 %568
    %v570 = vsel %vm62, %v569, 0
    %572 = vmatpush.msra.mxu0 0.0
    %573 = vmatpush.msra.mxu0 0.0
    %574 = vmatpush.msra.mxu0 0.0
    %575 = vmatpush.msra.mxu0 0.0
    %576 = vmatpush.msra.mxu0 0.0
    %577 = vmatpush.msra.mxu0 0.0
    %578 = vmatpush.msra.mxu0 0.0
    %579 = vmatpush.msra.mxu0 0.0
    %580 = vmatpush.msra.mxu0 0.0
    %581 = vmatpush.msra.mxu0 0.0
    %582 = vmatpush.msra.mxu0 0.0
    %583 = vmatpush.msra.mxu0 0.0
    %584 = vmatpush.msra.mxu0 %v42
    %585 = vmatpush.msra.mxu0 %v41
    %586 = vmatpush.msra.mxu0 %v40
    %587 = vmatpush.msra.mxu0 %v39
    %588 = vmatmul.f32.gmra.mxu0 %v570
    %v589 = vpop.f32.mrf.mxu0
    %v590 = vadd.f32 0.0, %v589
    %591 = vdwg.mxu0
    %v593 = vrot.slane %v565, 6
    %594 = vrot.lane.b32.xlu0 %v593, 64
    %v595 = vpop.permute.xlu0 %594
    %v596 = vsel %vm62, %v595, 0
    %598 = vmatpush.msra.mxu0 0.0
    %599 = vmatpush.msra.mxu0 0.0
    %600 = vmatpush.msra.mxu0 0.0
    %601 = vmatpush.msra.mxu0 0.0
    %602 = vmatpush.msra.mxu0 0.0
    %603 = vmatpush.msra.mxu0 0.0
    %604 = vmatpush.msra.mxu0 0.0
    %605 = vmatpush.msra.mxu0 0.0
    %606 = vmatpush.msra.mxu0 0.0
    %607 = vmatpush.msra.mxu0 0.0
    %608 = vmatpush.msra.mxu0 0.0
    %609 = vmatpush.msra.mxu0 0.0
    %610 = vmatpush.msra.mxu0 %v46
    %611 = vmatpush.msra.mxu0 %v45
    %612 = vmatpush.msra.mxu0 %v44
    %613 = vmatpush.msra.mxu0 %v43
    %614 = vmatmul.f32.gmra.mxu0 %v596
    %v615 = vpop.f32.mrf.mxu0
    %v616 = vadd.f32 0.0, %v615
    %617 = vdwg.mxu0
    %v619 = vrot.slane %v590, 2
    %v621 = vadd.f32 %v87, %v619
    %v622 = vxor.u32 %v621, 2147483648
    %v623 = vmul.f32 %v622, 1.442695
    %v624 = vpow.pop %v623
    %v625 = vadd.f32 %v624, 1.0
    %v626 = vrcp.pop %v625
    %v627 = vmul.f32 %v625, %v626
    %v628 = vsub.f32 1.0, %v627
    %v629 = vmul.f32 %v626, %v628
    %v630 = vadd.f32 %v626, %v629
    %vm631 = vweird.f32 %v625
    %vm632 = vweird.f32 %v626
    %vm633 = vmor %vm631, %vm632
    %v634 = vsel %vm633, %v626, %v630
    %v635 = vand.u32 2147483647, %v625
    %vm636 = vcmp.eq.f32.partialorder %v635, 8.507059e+37
    %v637 = vand.u32 %v625, 2147483648
    %v638 = vor.u32 1.1754944e-38, %v637
    %v639 = vsel %vm636, %v638, %v634
    %v640 = vmul.f32 1.0, %v639
    %v641 = vadd.f32 %v590, %v187
    %v643 = vrot.slane %v641, 2
    %644 = vrot.lane.b32.xlu0 %v643, 64
    %v645 = vpop.permute.xlu0 %644
    %v647 = vmul.f32 %v640, %v645
    %649 = vrot.lane.b32.xlu0 %v647, 64
    %v650 = vpop.permute.xlu0 %649
    %v652 = vadd.f32 %v87, %v650
    %v653 = vtanh.pop %v652
    %v655 = vrot.slane %v653, 2
    %v657 = vsub.f32 %v514, %v655
    %v659 = vrot.slane %v657, 6
    %660 = vrot.lane.b32.xlu0 %v659, 96
    %v661 = vpop.permute.xlu0 %660
    %v663 = vmul.f32 %v640, %v661
    %665 = vrot.lane.b32.xlu0 %v663, 32
    %v666 = vpop.permute.xlu0 %665
    %v668 = vadd.f32 %v653, %v666
    %v670 = vrot.slane %v616, 4
    %v672 = vadd.f32 %v116, %v670
    %v673 = vxor.u32 %v672, 2147483648
    %v674 = vmul.f32 %v673, 1.442695
    %v675 = vpow.pop %v674
    %v676 = vadd.f32 %v675, 1.0
    %v677 = vrcp.pop %v676
    %v678 = vmul.f32 %v676, %v677
    %v679 = vsub.f32 1.0, %v678
    %v680 = vmul.f32 %v677, %v679
    %v681 = vadd.f32 %v677, %v680
    %vm682 = vweird.f32 %v676
    %vm683 = vweird.f32 %v677
    %vm684 = vmor %vm682, %vm683
    %v685 = vsel %vm684, %v677, %v681
    %v686 = vand.u32 2147483647, %v676
    %vm687 = vcmp.eq.f32.partialorder %v686, 8.507059e+37
    %v688 = vand.u32 %v676, 2147483648
    %v689 = vor.u32 1.1754944e-38, %v688
    %v690 = vsel %vm687, %v689, %v685
    %v691 = vmul.f32 1.0, %v690
    %v692 = vadd.f32 %v616, %v238
    %v694 = vrot.slane %v692, 4
    %695 = vrot.lane.b32.xlu0 %v694, 64
    %v696 = vpop.permute.xlu0 %695
    %v698 = vmul.f32 %v691, %v696
    %700 = vrot.lane.b32.xlu0 %v698, 64
    %v701 = vpop.permute.xlu0 %700
    %v703 = vadd.f32 %v116, %v701
    %v704 = vtanh.pop %v703
    %v706 = vrot.slane %v704, 6
    %v708 = vsub.f32 %v565, %v706
    %v710 = vrot.slane %v708, 2
    %711 = vrot.lane.b32.xlu0 %v710, 96
    %v712 = vpop.permute.xlu0 %711
    %v714 = vmul.f32 %v691, %v712
    %716 = vrot.lane.b32.xlu0 %v714, 32
    %v717 = vpop.permute.xlu0 %716
    %v719 = vadd.f32 %v704, %v717
    %v721 = vrot.slane %v668, 6
    %722 = vrot.lane.b32.xlu0 %v721, 64
    %v723 = vpop.permute.xlu0 %722
    %v724 = vsel %vm62, %v723, 0
    %726 = vmatpush.msra.mxu0 0.0
    %727 = vmatpush.msra.mxu0 0.0
    %728 = vmatpush.msra.mxu0 0.0
    %729 = vmatpush.msra.mxu0 0.0
    %730 = vmatpush.msra.mxu0 0.0
    %731 = vmatpush.msra.mxu0 0.0
    %732 = vmatpush.msra.mxu0 0.0
    %733 = vmatpush.msra.mxu0 0.0
    %734 = vmatpush.msra.mxu0 0.0
    %735 = vmatpush.msra.mxu0 0.0
    %736 = vmatpush.msra.mxu0 0.0
    %737 = vmatpush.msra.mxu0 0.0
    %738 = vmatpush.msra.mxu0 %v42
    %739 = vmatpush.msra.mxu0 %v41
    %740 = vmatpush.msra.mxu0 %v40
    %741 = vmatpush.msra.mxu0 %v39
    %742 = vmatmul.f32.gmra.mxu0 %v724
    %v743 = vpop.f32.mrf.mxu0
    %v744 = vadd.f32 0.0, %v743
    %745 = vdwg.mxu0
    %v747 = vrot.slane %v719, 4
    %748 = vrot.lane.b32.xlu0 %v747, 64
    %v749 = vpop.permute.xlu0 %748
    %v750 = vsel %vm62, %v749, 0
    %752 = vmatpush.msra.mxu0 0.0
    %753 = vmatpush.msra.mxu0 0.0
    %754 = vmatpush.msra.mxu0 0.0
    %755 = vmatpush.msra.mxu0 0.0
    %756 = vmatpush.msra.mxu0 0.0
    %757 = vmatpush.msra.mxu0 0.0
    %758 = vmatpush.msra.mxu0 0.0
    %759 = vmatpush.msra.mxu0 0.0
    %760 = vmatpush.msra.mxu0 0.0
    %761 = vmatpush.msra.mxu0 0.0
    %762 = vmatpush.msra.mxu0 0.0
    %763 = vmatpush.msra.mxu0 0.0
    %764 = vmatpush.msra.mxu0 %v46
    %765 = vmatpush.msra.mxu0 %v45
    %766 = vmatpush.msra.mxu0 %v44
    %767 = vmatpush.msra.mxu0 %v43
    %768 = vmatmul.f32.gmra.mxu0 %v750
    %v769 = vpop.f32.mrf.mxu0
    %v770 = vadd.f32 0.0, %v769
    %771 = vdwg.mxu0
    %v772 = vadd.f32 %v90, %v744
    %v773 = vxor.u32 %v772, 2147483648
    %v774 = vmul.f32 %v773, 1.442695
    %v775 = vpow.pop %v774
    %v776 = vadd.f32 %v775, 1.0
    %v777 = vrcp.pop %v776
    %v778 = vmul.f32 %v776, %v777
    %v779 = vsub.f32 1.0, %v778
    %v780 = vmul.f32 %v777, %v779
    %v781 = vadd.f32 %v777, %v780
    %vm782 = vweird.f32 %v776
    %vm783 = vweird.f32 %v777
    %vm784 = vmor %vm782, %vm783
    %v785 = vsel %vm784, %v777, %v781
    %v786 = vand.u32 2147483647, %v776
    %vm787 = vcmp.eq.f32.partialorder %v786, 8.507059e+37
    %v788 = vand.u32 %v776, 2147483648
    %v789 = vor.u32 1.1754944e-38, %v788
    %v790 = vsel %vm787, %v789, %v785
    %v791 = vmul.f32 1.0, %v790
    %v792 = vadd.f32 %v744, %v187
    %794 = vrot.lane.b32.xlu0 %v792, 64
    %v795 = vpop.permute.xlu0 %794
    %v797 = vmul.f32 %v791, %v795
    %799 = vrot.lane.b32.xlu0 %v797, 64
    %v800 = vpop.permute.xlu0 %799
    %v802 = vadd.f32 %v90, %v800
    %v803 = vtanh.pop %v802
    %v805 = vrot.slane %v803, 2
    %v807 = vsub.f32 %v668, %v805
    %v809 = vrot.slane %v807, 6
    %810 = vrot.lane.b32.xlu0 %v809, 96
    %v811 = vpop.permute.xlu0 %810
    %v813 = vmul.f32 %v791, %v811
    %815 = vrot.lane.b32.xlu0 %v813, 32
    %v816 = vpop.permute.xlu0 %815
    %v818 = vadd.f32 %v803, %v816
    %v820 = vrot.slane %v770, 6
    %v822 = vadd.f32 %v116, %v820
    %v823 = vxor.u32 %v822, 2147483648
    %v824 = vmul.f32 %v823, 1.442695
    %v825 = vpow.pop %v824
    %v826 = vadd.f32 %v825, 1.0
    %v827 = vrcp.pop %v826
    %v828 = vmul.f32 %v826, %v827
    %v829 = vsub.f32 1.0, %v828
    %v830 = vmul.f32 %v827, %v829
    %v831 = vadd.f32 %v827, %v830
    %vm832 = vweird.f32 %v826
    %vm833 = vweird.f32 %v827
    %vm834 = vmor %vm832, %vm833
    %v835 = vsel %vm834, %v827, %v831
    %v836 = vand.u32 2147483647, %v826
    %vm837 = vcmp.eq.f32.partialorder %v836, 8.507059e+37
    %v838 = vand.u32 %v826, 2147483648
    %v839 = vor.u32 1.1754944e-38, %v838
    %v840 = vsel %vm837, %v839, %v835
    %v841 = vmul.f32 1.0, %v840
    %v842 = vadd.f32 %v770, %v238
    %v844 = vrot.slane %v842, 6
    %845 = vrot.lane.b32.xlu0 %v844, 64
    %v846 = vpop.permute.xlu0 %845
    %v848 = vmul.f32 %v841, %v846
    %850 = vrot.lane.b32.xlu0 %v848, 64
    %v851 = vpop.permute.xlu0 %850
    %v853 = vadd.f32 %v116, %v851
    %v854 = vtanh.pop %v853
    %v856 = vrot.slane %v854, 6
    %v858 = vsub.f32 %v719, %v856
    %v860 = vrot.slane %v858, 2
    %861 = vrot.lane.b32.xlu0 %v860, 96
    %v862 = vpop.permute.xlu0 %861
    %v864 = vmul.f32 %v841, %v862
    %866 = vrot.lane.b32.xlu0 %v864, 32
    %v867 = vpop.permute.xlu0 %866
    %v869 = vadd.f32 %v854, %v867
    %871 = vrot.lane.b32.xlu0 %v818, 64
    %v872 = vpop.permute.xlu0 %871
    %v873 = vsel %vm62, %v872, 0
    %875 = vmatpush.msra.mxu0 0.0
    %876 = vmatpush.msra.mxu0 0.0
    %877 = vmatpush.msra.mxu0 0.0
    %878 = vmatpush.msra.mxu0 0.0
    %879 = vmatpush.msra.mxu0 0.0
    %880 = vmatpush.msra.mxu0 0.0
    %881 = vmatpush.msra.mxu0 0.0
    %882 = vmatpush.msra.mxu0 0.0
    %883 = vmatpush.msra.mxu0 0.0
    %884 = vmatpush.msra.mxu0 0.0
    %885 = vmatpush.msra.mxu0 0.0
    %886 = vmatpush.msra.mxu0 0.0
    %887 = vmatpush.msra.mxu0 %v42
    %888 = vmatpush.msra.mxu0 %v41
    %889 = vmatpush.msra.mxu0 %v40
    %890 = vmatpush.msra.mxu0 %v39
    %891 = vmatmul.f32.gmra.mxu0 %v873
    %v892 = vpop.f32.mrf.mxu0
    %v893 = vadd.f32 0.0, %v892
    %894 = vdwg.mxu0
    %v896 = vrot.slane %v869, 2
    %897 = vrot.lane.b32.xlu0 %v896, 64
    %v898 = vpop.permute.xlu0 %897
    %v899 = vsel %vm62, %v898, 0
    %901 = vmatpush.msra.mxu0 0.0
    %902 = vmatpush.msra.mxu0 0.0
    %903 = vmatpush.msra.mxu0 0.0
    %904 = vmatpush.msra.mxu0 0.0
    %905 = vmatpush.msra.mxu0 0.0
    %906 = vmatpush.msra.mxu0 0.0
    %907 = vmatpush.msra.mxu0 0.0
    %908 = vmatpush.msra.mxu0 0.0
    %909 = vmatpush.msra.mxu0 0.0
    %910 = vmatpush.msra.mxu0 0.0
    %911 = vmatpush.msra.mxu0 0.0
    %912 = vmatpush.msra.mxu0 0.0
    %913 = vmatpush.msra.mxu0 %v46
    %914 = vmatpush.msra.mxu0 %v45
    %915 = vmatpush.msra.mxu0 %v44
    %916 = vmatpush.msra.mxu0 %v43
    %917 = vmatmul.f32.gmra.mxu0 %v899
    %v918 = vpop.f32.mrf.mxu0
    %v919 = vadd.f32 0.0, %v918
    %920 = vdwg.mxu0
    %v922 = vrot.slane %v893, 6
    %v924 = vadd.f32 %v90, %v922
    %v925 = vxor.u32 %v924, 2147483648
    %v926 = vmul.f32 %v925, 1.442695
    %v927 = vpow.pop %v926
    %v928 = vadd.f32 %v927, 1.0
    %v929 = vrcp.pop %v928
    %v930 = vmul.f32 %v928, %v929
    %v931 = vsub.f32 1.0, %v930
    %v932 = vmul.f32 %v929, %v931
    %v933 = vadd.f32 %v929, %v932
    %vm934 = vweird.f32 %v928
    %vm935 = vweird.f32 %v929
    %vm936 = vmor %vm934, %vm935
    %v937 = vsel %vm936, %v929, %v933
    %v938 = vand.u32 2147483647, %v928
    %vm939 = vcmp.eq.f32.partialorder %v938, 8.507059e+37
    %v940 = vand.u32 %v928, 2147483648
    %v941 = vor.u32 1.1754944e-38, %v940
    %v942 = vsel %vm939, %v941, %v937
    %v943 = vmul.f32 1.0, %v942
    %v944 = vadd.f32 %v893, %v187
    %v946 = vrot.slane %v944, 6
    %947 = vrot.lane.b32.xlu0 %v946, 64
    %v948 = vpop.permute.xlu0 %947
    %v950 = vmul.f32 %v943, %v948
    %952 = vrot.lane.b32.xlu0 %v950, 64
    %v953 = vpop.permute.xlu0 %952
    %v955 = vadd.f32 %v90, %v953
    %v956 = vtanh.pop %v955
    %v958 = vrot.slane %v956, 2
    %v960 = vsub.f32 %v818, %v958
    %v962 = vrot.slane %v960, 6
    %963 = vrot.lane.b32.xlu0 %v962, 96
    %v964 = vpop.permute.xlu0 %963
    %v966 = vmul.f32 %v943, %v964
    %968 = vrot.lane.b32.xlu0 %v966, 32
    %v969 = vpop.permute.xlu0 %968
    %v971 = vadd.f32 %v956, %v969
    %v972 = vadd.f32 %v116, %v919
    %v973 = vxor.u32 %v972, 2147483648
    %v974 = vmul.f32 %v973, 1.442695
    %v975 = vpow.pop %v974
    %v976 = vadd.f32 %v975, 1.0
    %v977 = vrcp.pop %v976
    %v978 = vmul.f32 %v976, %v977
    %v979 = vsub.f32 1.0, %v978
    %v980 = vmul.f32 %v977, %v979
    %v981 = vadd.f32 %v977, %v980
    %vm982 = vweird.f32 %v976
    %vm983 = vweird.f32 %v977
    %vm984 = vmor %vm982, %vm983
    %v985 = vsel %vm984, %v977, %v981
    %v986 = vand.u32 2147483647, %v976
    %vm987 = vcmp.eq.f32.partialorder %v986, 8.507059e+37
    %v988 = vand.u32 %v976, 2147483648
    %v989 = vor.u32 1.1754944e-38, %v988
    %v990 = vsel %vm987, %v989, %v985
    %v991 = vmul.f32 1.0, %v990
    %v992 = vadd.f32 %v919, %v238
    %994 = vrot.lane.b32.xlu0 %v992, 64
    %v995 = vpop.permute.xlu0 %994
    %v997 = vmul.f32 %v991, %v995
    %999 = vrot.lane.b32.xlu0 %v997, 64
    %v1000 = vpop.permute.xlu0 %999
    %v1002 = vadd.f32 %v116, %v1000
    %v1003 = vtanh.pop %v1002
    %v1005 = vrot.slane %v1003, 6
    %v1007 = vsub.f32 %v869, %v1005
    %v1009 = vrot.slane %v1007, 2
    %1010 = vrot.lane.b32.xlu0 %v1009, 96
    %v1011 = vpop.permute.xlu0 %1010
    %v1013 = vmul.f32 %v991, %v1011
    %1015 = vrot.lane.b32.xlu0 %v1013, 32
    %v1016 = vpop.permute.xlu0 %1015
    %v1018 = vadd.f32 %v1003, %v1016
    %1020 = vrot.lane.b32.xlu0 %v971, 64
    %v1021 = vpop.permute.xlu0 %1020
    %v1024 = vrot.slane %v1018, 6
    %1025 = vrot.lane.b32.xlu0 %v1024, 96
    %v1026 = vpop.permute.xlu0 %1025
    %v1028 = vsel %vm62, %v1021, %v1026
    %v1029 = vld [vmem:[%s1] sm:$0xff]
    %v1030 = vld [vmem:[%s1 + $0x8] sm:$0xff]
    %v1031 = vld [vmem:[#allocation2] sm:$0xff]
    %vm1032 = vcmask 64512
    %v1034 = vsel %vm1032, %v1029, 0
    %v1037 = vsel %vm1032, %v1030, 0
    %1039 = vmatpush.msra.mxu0 0.0
    %1040 = vmatpush.msra.mxu0 0.0
    %1041 = vmatpush.msra.mxu0 0.0
    %1042 = vmatpush.msra.mxu0 0.0
    %1043 = vmatpush.msra.mxu0 0.0
    %1044 = vmatpush.msra.mxu0 0.0
    %1045 = vmatpush.msra.mxu0 0.0
    %1046 = vmatpush.msra.mxu0 0.0
    %1047 = vmatpush.msra.mxu0 0.0
    %1048 = vmatpush.msra.mxu0 0.0
    %1049 = vmatpush.msra.mxu0 0.0
    %1050 = vmatpush.msra.mxu0 0.0
    %1051 = vmatpush.msra.mxu0 0.0
    %1052 = vmatpush.msra.mxu0 0.0
    %1053 = vmatpush.msra.mxu0 0.0
    %1054 = vmatpush.msra.mxu0 %v1031
    %1055 = vmatmul.f32.gmra.mxu0 %v1034
    %v1056 = vpop.f32.mrf.mxu0
    %v1057 = vadd.f32 0.0, %v1056
    %1058 = vmatmul.f32.gmra.mxu0 %v1037
    %v1059 = vpop.f32.mrf.mxu0
    %v1060 = vadd.f32 0.0, %v1059
    %1061 = vdwg.mxu0
    %v1062 = vld [vmem:[#allocation2 + $0x8] sm:$0xff]
    %v1063 = vld [vmem:[#allocation2 + $0x10] sm:$0xff]
    %v1064 = vld [vmem:[#allocation2 + $0x18] sm:$0xff]
    %v1065 = vld [vmem:[#allocation2 + $0x20] sm:$0xff]
    %v1066 = vld [vmem:[#allocation2 + $0x28] sm:$0xff]
    %v1067 = vld [vmem:[#allocation2 + $0x30] sm:$0xff]
    %v1068 = vld [vmem:[#allocation2 + $0x38] sm:$0xff]
    %v1069 = vld [vmem:[#allocation2 + $0x40] sm:$0xff]
    %v1070 = vld [vmem:[%s5 + $0x4] sm:$0x1]
    %v1071 = vperm.slane %v1070, 0
    %v1073 = vrot.slane %v1028, 2
    %vm1074 = vcmask 523264
    %v1075 = vsel %vm1074, %v1073, 0
    %1077 = vmatpush.msra.mxu0 0.0
    %1078 = vmatpush.msra.mxu0 0.0
    %1079 = vmatpush.msra.mxu0 0.0
    %1080 = vmatpush.msra.mxu0 0.0
    %1081 = vmatpush.msra.mxu0 0.0
    %1082 = vmatpush.msra.mxu0 0.0
    %1083 = vmatpush.msra.mxu0 0.0
    %1084 = vmatpush.msra.mxu0 0.0
    %1085 = vmatpush.msra.mxu0 %v1069
    %1086 = vmatpush.msra.mxu0 %v1068
    %1087 = vmatpush.msra.mxu0 %v1067
    %1088 = vmatpush.msra.mxu0 %v1066
    %1089 = vmatpush.msra.mxu0 %v1065
    %1090 = vmatpush.msra.mxu0 %v1064
    %1091 = vmatpush.msra.mxu0 %v1063
    %1092 = vmatpush.msra.mxu0 %v1062
    %1093 = vmatmul.f32.gmra.mxu0 %v1075
    %v1094 = vpop.f32.mrf.mxu0
    %v1095 = vadd.f32 %v1071, %v1094
    %1096 = vdwg.mxu0
    %v1097 = vld [vmem:[%s2] sm:$0x3]
    %v1098 = vadd.f32 %v1057, %v1095
    %v1100 = vsel %vm62, %v1097, 0
    %1102 = vmatpush.msra.mxu0 0.0
    %1103 = vmatpush.msra.mxu0 0.0
    %1104 = vmatpush.msra.mxu0 0.0
    %1105 = vmatpush.msra.mxu0 0.0
    %1106 = vmatpush.msra.mxu0 0.0
    %1107 = vmatpush.msra.mxu0 0.0
    %1108 = vmatpush.msra.mxu0 0.0
    %1109 = vmatpush.msra.mxu0 0.0
    %1110 = vmatpush.msra.mxu0 0.0
    %1111 = vmatpush.msra.mxu0 0.0
    %1112 = vmatpush.msra.mxu0 0.0
    %1113 = vmatpush.msra.mxu0 0.0
    %1114 = vmatpush.msra.mxu0 %v50
    %1115 = vmatpush.msra.mxu0 %v49
    %1116 = vmatpush.msra.mxu0 %v48
    %1117 = vmatpush.msra.mxu0 %v47
    %1118 = vmatmul.f32.gmra.mxu0 %v1100
    %v1119 = vpop.f32.mrf.mxu0
    %v1120 = vadd.f32 0.0, %v1119
    %1121 = vdwg.mxu0
    %v1122 = vadd.f32 %v1098, %v1120
    %v1123 = vxor.u32 %v1122, 2147483648
    %v1124 = vmul.f32 %v1123, 1.442695
    %v1125 = vpow.pop %v1124
    %v1126 = vadd.f32 %v1125, 1.0
    %v1127 = vrcp.pop %v1126
    %v1128 = vmul.f32 %v1126, %v1127
    %v1129 = vsub.f32 1.0, %v1128
    %v1130 = vmul.f32 %v1127, %v1129
    %v1131 = vadd.f32 %v1127, %v1130
    %vm1132 = vweird.f32 %v1126
    %vm1133 = vweird.f32 %v1127
    %vm1134 = vmor %vm1132, %vm1133
    %v1135 = vsel %vm1134, %v1127, %v1131
    %v1136 = vand.u32 2147483647, %v1126
    %vm1137 = vcmp.eq.f32.partialorder %v1136, 8.507059e+37
    %v1138 = vand.u32 %v1126, 2147483648
    %v1139 = vor.u32 1.1754944e-38, %v1138
    %v1140 = vsel %vm1137, %v1139, %v1135
    %v1141 = vmul.f32 1.0, %v1140
    %v1142 = vperm.slane %v53, 0
    %1144 = vrot.lane.b32.xlu0 %v1142, 64
    %v1145 = vpop.permute.xlu0 %1144
    %v1147 = vadd.f32 %v1120, %v1145
    %1149 = vrot.lane.b32.xlu0 %v1147, 64
    %v1150 = vpop.permute.xlu0 %1149
    %v1152 = vmul.f32 %v1141, %v1150
    %1154 = vrot.lane.b32.xlu0 %v1152, 64
    %v1155 = vpop.permute.xlu0 %1154
    %v1157 = vadd.f32 %v1098, %v1155
    %v1158 = vtanh.pop %v1157
    %1160 = vrot.lane.b32.xlu0 %v1158, 64
    %v1161 = vpop.permute.xlu0 %1160
    %v1163 = vsub.f32 %v1097, %v1161
    %1165 = vrot.lane.b32.xlu0 %v1163, 32
    %v1166 = vpop.permute.xlu0 %1165
    %v1168 = vmul.f32 %v1141, %v1166
    %1170 = vrot.lane.b32.xlu0 %v1168, 32
    %v1171 = vpop.permute.xlu0 %1170
    %v1173 = vadd.f32 %v1158, %v1171
    %1175 = vrot.lane.b32.xlu0 %v1173, 64
    %v1176 = vpop.permute.xlu0 %1175
    %vm1178 = vcmask 254976
    %1179 = vst.msk [vmem:[%s6] sm:$0x3] %vm1178, %v1176
    %v1181 = vrot.slane %v1095, 6
    %v1183 = vadd.f32 %v1057, %v1181
    %v1184 = vsel %vm62, %v1176, 0
    %1186 = vmatpush.msra.mxu0 0.0
    %1187 = vmatpush.msra.mxu0 0.0
    %1188 = vmatpush.msra.mxu0 0.0
    %1189 = vmatpush.msra.mxu0 0.0
    %1190 = vmatpush.msra.mxu0 0.0
    %1191 = vmatpush.msra.mxu0 0.0
    %1192 = vmatpush.msra.mxu0 0.0
    %1193 = vmatpush.msra.mxu0 0.0
    %1194 = vmatpush.msra.mxu0 0.0
    %1195 = vmatpush.msra.mxu0 0.0
    %1196 = vmatpush.msra.mxu0 0.0
    %1197 = vmatpush.msra.mxu0 0.0
    %1198 = vmatpush.msra.mxu0 %v50
    %1199 = vmatpush.msra.mxu0 %v49
    %1200 = vmatpush.msra.mxu0 %v48
    %1201 = vmatpush.msra.mxu0 %v47
    %1202 = vmatmul.f32.gmra.mxu0 %v1184
    %v1203 = vpop.f32.mrf.mxu0
    %v1204 = vadd.f32 0.0, %v1203
    %1205 = vdwg.mxu0
    %v1207 = vrot.slane %v1204, 6
    %v1209 = vadd.f32 %v1183, %v1207
    %v1210 = vxor.u32 %v1209, 2147483648
    %v1211 = vmul.f32 %v1210, 1.442695
    %v1212 = vpow.pop %v1211
    %v1213 = vadd.f32 %v1212, 1.0
    %v1214 = vrcp.pop %v1213
    %v1215 = vmul.f32 %v1213, %v1214
    %v1216 = vsub.f32 1.0, %v1215
    %v1217 = vmul.f32 %v1214, %v1216
    %v1218 = vadd.f32 %v1214, %v1217
    %vm1219 = vweird.f32 %v1213
    %vm1220 = vweird.f32 %v1214
    %vm1221 = vmor %vm1219, %vm1220
    %v1222 = vsel %vm1221, %v1214, %v1218
    %v1223 = vand.u32 2147483647, %v1213
    %vm1224 = vcmp.eq.f32.partialorder %v1223, 8.507059e+37
    %v1225 = vand.u32 %v1213, 2147483648
    %v1226 = vor.u32 1.1754944e-38, %v1225
    %v1227 = vsel %vm1224, %v1226, %v1222
    %v1228 = vmul.f32 1.0, %v1227
    %v1229 = vadd.f32 %v1204, %v1145
    %v1231 = vrot.slane %v1229, 6
    %1232 = vrot.lane.b32.xlu0 %v1231, 64
    %v1233 = vpop.permute.xlu0 %1232
    %v1235 = vmul.f32 %v1228, %v1233
    %1237 = vrot.lane.b32.xlu0 %v1235, 64
    %v1238 = vpop.permute.xlu0 %1237
    %v1240 = vadd.f32 %v1183, %v1238
    %v1241 = vtanh.pop %v1240
    %v1243 = vrot.slane %v1241, 2
    %v1245 = vsub.f32 %v1173, %v1243
    %v1247 = vrot.slane %v1245, 6
    %1248 = vrot.lane.b32.xlu0 %v1247, 96
    %v1249 = vpop.permute.xlu0 %1248
    %v1251 = vmul.f32 %v1228, %v1249
    %1253 = vrot.lane.b32.xlu0 %v1251, 32
    %v1254 = vpop.permute.xlu0 %1253
    %v1256 = vadd.f32 %v1241, %v1254
    %1258 = vrot.lane.b32.xlu0 %v1256, 64
    %v1259 = vpop.permute.xlu0 %1258
    %vm1261 = vcmask 257026
    %1262 = vst.msk [vmem:[%s6] sm:$0xc] %vm1261, %v1259
    %v1263 = vrot.slane %v1095, 4
    %v1265 = vadd.f32 %v1057, %v1263
    %v1266 = vrot.slane %v1256, 2
    %1267 = vrot.lane.b32.xlu0 %v1266, 64
    %v1268 = vpop.permute.xlu0 %1267
    %v1269 = vsel %vm62, %v1268, 0
    %1271 = vmatpush.msra.mxu0 0.0
    %1272 = vmatpush.msra.mxu0 0.0
    %1273 = vmatpush.msra.mxu0 0.0
    %1274 = vmatpush.msra.mxu0 0.0
    %1275 = vmatpush.msra.mxu0 0.0
    %1276 = vmatpush.msra.mxu0 0.0
    %1277 = vmatpush.msra.mxu0 0.0
    %1278 = vmatpush.msra.mxu0 0.0
    %1279 = vmatpush.msra.mxu0 0.0
    %1280 = vmatpush.msra.mxu0 0.0
    %1281 = vmatpush.msra.mxu0 0.0
    %1282 = vmatpush.msra.mxu0 0.0
    %1283 = vmatpush.msra.mxu0 %v50
    %1284 = vmatpush.msra.mxu0 %v49
    %1285 = vmatpush.msra.mxu0 %v48
    %1286 = vmatpush.msra.mxu0 %v47
    %1287 = vmatmul.f32.gmra.mxu0 %v1269
    %v1288 = vpop.f32.mrf.mxu0
    %v1289 = vadd.f32 0.0, %v1288
    %1290 = vdwg.mxu0
    %v1292 = vrot.slane %v1289, 4
    %v1294 = vadd.f32 %v1265, %v1292
    %v1295 = vxor.u32 %v1294, 2147483648
    %v1296 = vmul.f32 %v1295, 1.442695
    %v1297 = vpow.pop %v1296
    %v1298 = vadd.f32 %v1297, 1.0
    %v1299 = vrcp.pop %v1298
    %v1300 = vmul.f32 %v1298, %v1299
    %v1301 = vsub.f32 1.0, %v1300
    %v1302 = vmul.f32 %v1299, %v1301
    %v1303 = vadd.f32 %v1299, %v1302
    %vm1304 = vweird.f32 %v1298
    %vm1305 = vweird.f32 %v1299
    %vm1306 = vmor %vm1304, %vm1305
    %v1307 = vsel %vm1306, %v1299, %v1303
    %v1308 = vand.u32 2147483647, %v1298
    %vm1309 = vcmp.eq.f32.partialorder %v1308, 8.507059e+37
    %v1310 = vand.u32 %v1298, 2147483648
    %v1311 = vor.u32 1.1754944e-38, %v1310
    %v1312 = vsel %vm1309, %v1311, %v1307
    %v1313 = vmul.f32 1.0, %v1312
    %v1314 = vadd.f32 %v1289, %v1145
    %v1316 = vrot.slane %v1314, 4
    %1317 = vrot.lane.b32.xlu0 %v1316, 64
    %v1318 = vpop.permute.xlu0 %1317
    %v1320 = vmul.f32 %v1313, %v1318
    %1322 = vrot.lane.b32.xlu0 %v1320, 64
    %v1323 = vpop.permute.xlu0 %1322
    %v1325 = vadd.f32 %v1265, %v1323
    %v1326 = vtanh.pop %v1325
    %v1328 = vrot.slane %v1326, 2
    %v1330 = vsub.f32 %v1256, %v1328
    %v1332 = vrot.slane %v1330, 6
    %1333 = vrot.lane.b32.xlu0 %v1332, 96
    %v1334 = vpop.permute.xlu0 %1333
    %v1336 = vmul.f32 %v1313, %v1334
    %1338 = vrot.lane.b32.xlu0 %v1336, 32
    %v1339 = vpop.permute.xlu0 %1338
    %v1341 = vadd.f32 %v1326, %v1339
    %1343 = vrot.lane.b32.xlu0 %v1341, 64
    %v1344 = vpop.permute.xlu0 %1343
    %vm1346 = vcmask 259076
    %1347 = vst.msk [vmem:[%s6] sm:$0x30] %vm1346, %v1344
    %v1348 = vrot.slane %v1095, 2
    %v1350 = vadd.f32 %v1057, %v1348
    %v1351 = vrot.slane %v1341, 4
    %1352 = vrot.lane.b32.xlu0 %v1351, 64
    %v1353 = vpop.permute.xlu0 %1352
    %v1354 = vsel %vm62, %v1353, 0
    %1356 = vmatpush.msra.mxu0 0.0
    %1357 = vmatpush.msra.mxu0 0.0
    %1358 = vmatpush.msra.mxu0 0.0
    %1359 = vmatpush.msra.mxu0 0.0
    %1360 = vmatpush.msra.mxu0 0.0
    %1361 = vmatpush.msra.mxu0 0.0
    %1362 = vmatpush.msra.mxu0 0.0
    %1363 = vmatpush.msra.mxu0 0.0
    %1364 = vmatpush.msra.mxu0 0.0
    %1365 = vmatpush.msra.mxu0 0.0
    %1366 = vmatpush.msra.mxu0 0.0
    %1367 = vmatpush.msra.mxu0 0.0
    %1368 = vmatpush.msra.mxu0 %v50
    %1369 = vmatpush.msra.mxu0 %v49
    %1370 = vmatpush.msra.mxu0 %v48
    %1371 = vmatpush.msra.mxu0 %v47
    %1372 = vmatmul.f32.gmra.mxu0 %v1354
    %v1373 = vpop.f32.mrf.mxu0
    %v1374 = vadd.f32 0.0, %v1373
    %1375 = vdwg.mxu0
    %v1377 = vrot.slane %v1374, 2
    %v1379 = vadd.f32 %v1350, %v1377
    %v1380 = vxor.u32 %v1379, 2147483648
    %v1381 = vmul.f32 %v1380, 1.442695
    %v1382 = vpow.pop %v1381
    %v1383 = vadd.f32 %v1382, 1.0
    %v1384 = vrcp.pop %v1383
    %v1385 = vmul.f32 %v1383, %v1384
    %v1386 = vsub.f32 1.0, %v1385
    %v1387 = vmul.f32 %v1384, %v1386
    %v1388 = vadd.f32 %v1384, %v1387
    %vm1389 = vweird.f32 %v1383
    %vm1390 = vweird.f32 %v1384
    %vm1391 = vmor %vm1389, %vm1390
    %v1392 = vsel %vm1391, %v1384, %v1388
    %v1393 = vand.u32 2147483647, %v1383
    %vm1394 = vcmp.eq.f32.partialorder %v1393, 8.507059e+37
    %v1395 = vand.u32 %v1383, 2147483648
    %v1396 = vor.u32 1.1754944e-38, %v1395
    %v1397 = vsel %vm1394, %v1396, %v1392
    %v1398 = vmul.f32 1.0, %v1397
    %v1399 = vadd.f32 %v1374, %v1145
    %v1401 = vrot.slane %v1399, 2
    %1402 = vrot.lane.b32.xlu0 %v1401, 64
    %v1403 = vpop.permute.xlu0 %1402
    %v1405 = vmul.f32 %v1398, %v1403
    %1407 = vrot.lane.b32.xlu0 %v1405, 64
    %v1408 = vpop.permute.xlu0 %1407
    %v1410 = vadd.f32 %v1350, %v1408
    %v1411 = vtanh.pop %v1410
    %v1413 = vrot.slane %v1411, 2
    %v1415 = vsub.f32 %v1341, %v1413
    %v1417 = vrot.slane %v1415, 6
    %1418 = vrot.lane.b32.xlu0 %v1417, 96
    %v1419 = vpop.permute.xlu0 %1418
    %v1421 = vmul.f32 %v1398, %v1419
    %1423 = vrot.lane.b32.xlu0 %v1421, 32
    %v1424 = vpop.permute.xlu0 %1423
    %v1426 = vadd.f32 %v1411, %v1424
    %1428 = vrot.lane.b32.xlu0 %v1426, 64
    %v1429 = vpop.permute.xlu0 %1428
    %vm1431 = vcmask 261126
    %1432 = vst.msk [vmem:[%s6] sm:$0xc0] %vm1431, %v1429
    %v1433 = vadd.f32 %v1060, %v1095
    %v1434 = vrot.slane %v1426, 6
    %1435 = vrot.lane.b32.xlu0 %v1434, 64
    %v1436 = vpop.permute.xlu0 %1435
    %v1437 = vsel %vm62, %v1436, 0
    %1439 = vmatpush.msra.mxu0 0.0
    %1440 = vmatpush.msra.mxu0 0.0
    %1441 = vmatpush.msra.mxu0 0.0
    %1442 = vmatpush.msra.mxu0 0.0
    %1443 = vmatpush.msra.mxu0 0.0
    %1444 = vmatpush.msra.mxu0 0.0
    %1445 = vmatpush.msra.mxu0 0.0
    %1446 = vmatpush.msra.mxu0 0.0
    %1447 = vmatpush.msra.mxu0 0.0
    %1448 = vmatpush.msra.mxu0 0.0
    %1449 = vmatpush.msra.mxu0 0.0
    %1450 = vmatpush.msra.mxu0 0.0
    %1451 = vmatpush.msra.mxu0 %v50
    %1452 = vmatpush.msra.mxu0 %v49
    %1453 = vmatpush.msra.mxu0 %v48
    %1454 = vmatpush.msra.mxu0 %v47
    %1455 = vmatmul.f32.gmra.mxu0 %v1437
    %v1456 = vpop.f32.mrf.mxu0
    %v1457 = vadd.f32 0.0, %v1456
    %1458 = vdwg.mxu0
    %v1459 = vadd.f32 %v1433, %v1457
    %v1460 = vxor.u32 %v1459, 2147483648
    %v1461 = vmul.f32 %v1460, 1.442695
    %v1462 = vpow.pop %v1461
    %v1463 = vadd.f32 %v1462, 1.0
    %v1464 = vrcp.pop %v1463
    %v1465 = vmul.f32 %v1463, %v1464
    %v1466 = vsub.f32 1.0, %v1465
    %v1467 = vmul.f32 %v1464, %v1466
    %v1468 = vadd.f32 %v1464, %v1467
    %vm1469 = vweird.f32 %v1463
    %vm1470 = vweird.f32 %v1464
    %vm1471 = vmor %vm1469, %vm1470
    %v1472 = vsel %vm1471, %v1464, %v1468
    %v1473 = vand.u32 2147483647, %v1463
    %vm1474 = vcmp.eq.f32.partialorder %v1473, 8.507059e+37
    %v1475 = vand.u32 %v1463, 2147483648
    %v1476 = vor.u32 1.1754944e-38, %v1475
    %v1477 = vsel %vm1474, %v1476, %v1472
    %v1478 = vmul.f32 1.0, %v1477
    %v1479 = vadd.f32 %v1457, %v1145
    %1481 = vrot.lane.b32.xlu0 %v1479, 64
    %v1482 = vpop.permute.xlu0 %1481
    %v1484 = vmul.f32 %v1478, %v1482
    %1486 = vrot.lane.b32.xlu0 %v1484, 64
    %v1487 = vpop.permute.xlu0 %1486
    %v1489 = vadd.f32 %v1433, %v1487
    %v1490 = vtanh.pop %v1489
    %v1492 = vrot.slane %v1490, 2
    %v1494 = vsub.f32 %v1426, %v1492
    %v1496 = vrot.slane %v1494, 6
    %1497 = vrot.lane.b32.xlu0 %v1496, 96
    %v1498 = vpop.permute.xlu0 %1497
    %v1500 = vmul.f32 %v1478, %v1498
    %1502 = vrot.lane.b32.xlu0 %v1500, 32
    %v1503 = vpop.permute.xlu0 %1502
    %v1505 = vadd.f32 %v1490, %v1503
    %1507 = vrot.lane.b32.xlu0 %v1505, 64
    %v1508 = vpop.permute.xlu0 %1507
    %1510 = vst.msk [vmem:[%s6 + $0x8] sm:$0x3] %vm1178, %v1508
    %v1511 = vadd.f32 %v1060, %v1181
    %v1512 = vsel %vm62, %v1508, 0
    %1514 = vmatpush.msra.mxu0 0.0
    %1515 = vmatpush.msra.mxu0 0.0
    %1516 = vmatpush.msra.mxu0 0.0
    %1517 = vmatpush.msra.mxu0 0.0
    %1518 = vmatpush.msra.mxu0 0.0
    %1519 = vmatpush.msra.mxu0 0.0
    %1520 = vmatpush.msra.mxu0 0.0
    %1521 = vmatpush.msra.mxu0 0.0
    %1522 = vmatpush.msra.mxu0 0.0
    %1523 = vmatpush.msra.mxu0 0.0
    %1524 = vmatpush.msra.mxu0 0.0
    %1525 = vmatpush.msra.mxu0 0.0
    %1526 = vmatpush.msra.mxu0 %v50
    %1527 = vmatpush.msra.mxu0 %v49
    %1528 = vmatpush.msra.mxu0 %v48
    %1529 = vmatpush.msra.mxu0 %v47
    %1530 = vmatmul.f32.gmra.mxu0 %v1512
    %v1531 = vpop.f32.mrf.mxu0
    %v1532 = vadd.f32 0.0, %v1531
    %1533 = vdwg.mxu0
    %v1535 = vrot.slane %v1532, 6
    %v1537 = vadd.f32 %v1511, %v1535
    %v1538 = vxor.u32 %v1537, 2147483648
    %v1539 = vmul.f32 %v1538, 1.442695
    %v1540 = vpow.pop %v1539
    %v1541 = vadd.f32 %v1540, 1.0
    %v1542 = vrcp.pop %v1541
    %v1543 = vmul.f32 %v1541, %v1542
    %v1544 = vsub.f32 1.0, %v1543
    %v1545 = vmul.f32 %v1542, %v1544
    %v1546 = vadd.f32 %v1542, %v1545
    %vm1547 = vweird.f32 %v1541
    %vm1548 = vweird.f32 %v1542
    %vm1549 = vmor %vm1547, %vm1548
    %v1550 = vsel %vm1549, %v1542, %v1546
    %v1551 = vand.u32 2147483647, %v1541
    %vm1552 = vcmp.eq.f32.partialorder %v1551, 8.507059e+37
    %v1553 = vand.u32 %v1541, 2147483648
    %v1554 = vor.u32 1.1754944e-38, %v1553
    %v1555 = vsel %vm1552, %v1554, %v1550
    %v1556 = vmul.f32 1.0, %v1555
    %v1557 = vadd.f32 %v1532, %v1145
    %v1559 = vrot.slane %v1557, 6
    %1560 = vrot.lane.b32.xlu0 %v1559, 64
    %v1561 = vpop.permute.xlu0 %1560
    %v1563 = vmul.f32 %v1556, %v1561
    %1565 = vrot.lane.b32.xlu0 %v1563, 64
    %v1566 = vpop.permute.xlu0 %1565
    %v1568 = vadd.f32 %v1511, %v1566
    %v1569 = vtanh.pop %v1568
    %v1571 = vrot.slane %v1569, 2
    %v1573 = vsub.f32 %v1505, %v1571
    %v1575 = vrot.slane %v1573, 6
    %1576 = vrot.lane.b32.xlu0 %v1575, 96
    %v1577 = vpop.permute.xlu0 %1576
    %v1579 = vmul.f32 %v1556, %v1577
    %1581 = vrot.lane.b32.xlu0 %v1579, 32
    %v1582 = vpop.permute.xlu0 %1581
    %v1584 = vadd.f32 %v1569, %v1582
    %1586 = vrot.lane.b32.xlu0 %v1584, 64
    %v1587 = vpop.permute.xlu0 %1586
    %1589 = vst.msk [vmem:[%s6 + $0x8] sm:$0xc] %vm1261, %v1587
    %v1590 = vadd.f32 %v1060, %v1263
    %v1591 = vrot.slane %v1584, 2
    %1592 = vrot.lane.b32.xlu0 %v1591, 64
    %v1593 = vpop.permute.xlu0 %1592
    %v1594 = vsel %vm62, %v1593, 0
    %1596 = vmatpush.msra.mxu0 0.0
    %1597 = vmatpush.msra.mxu0 0.0
    %1598 = vmatpush.msra.mxu0 0.0
    %1599 = vmatpush.msra.mxu0 0.0
    %1600 = vmatpush.msra.mxu0 0.0
    %1601 = vmatpush.msra.mxu0 0.0
    %1602 = vmatpush.msra.mxu0 0.0
    %1603 = vmatpush.msra.mxu0 0.0
    %1604 = vmatpush.msra.mxu0 0.0
    %1605 = vmatpush.msra.mxu0 0.0
    %1606 = vmatpush.msra.mxu0 0.0
    %1607 = vmatpush.msra.mxu0 0.0
    %1608 = vmatpush.msra.mxu0 %v50
    %1609 = vmatpush.msra.mxu0 %v49
    %1610 = vmatpush.msra.mxu0 %v48
    %1611 = vmatpush.msra.mxu0 %v47
    %1612 = vmatmul.f32.gmra.mxu0 %v1594
    %v1613 = vpop.f32.mrf.mxu0
    %v1614 = vadd.f32 0.0, %v1613
    %1615 = vdwg.mxu0
    %v1617 = vrot.slane %v1614, 4
    %v1619 = vadd.f32 %v1590, %v1617
    %v1620 = vxor.u32 %v1619, 2147483648
    %v1621 = vmul.f32 %v1620, 1.442695
    %v1622 = vpow.pop %v1621
    %v1623 = vadd.f32 %v1622, 1.0
    %v1624 = vrcp.pop %v1623
    %v1625 = vmul.f32 %v1623, %v1624
    %v1626 = vsub.f32 1.0, %v1625
    %v1627 = vmul.f32 %v1624, %v1626
    %v1628 = vadd.f32 %v1624, %v1627
    %vm1629 = vweird.f32 %v1623
    %vm1630 = vweird.f32 %v1624
    %vm1631 = vmor %vm1629, %vm1630
    %v1632 = vsel %vm1631, %v1624, %v1628
    %v1633 = vand.u32 2147483647, %v1623
    %vm1634 = vcmp.eq.f32.partialorder %v1633, 8.507059e+37
    %v1635 = vand.u32 %v1623, 2147483648
    %v1636 = vor.u32 1.1754944e-38, %v1635
    %v1637 = vsel %vm1634, %v1636, %v1632
    %v1638 = vmul.f32 1.0, %v1637
    %v1639 = vadd.f32 %v1614, %v1145
    %v1641 = vrot.slane %v1639, 4
    %1642 = vrot.lane.b32.xlu0 %v1641, 64
    %v1643 = vpop.permute.xlu0 %1642
    %v1645 = vmul.f32 %v1638, %v1643
    %1647 = vrot.lane.b32.xlu0 %v1645, 64
    %v1648 = vpop.permute.xlu0 %1647
    %v1650 = vadd.f32 %v1590, %v1648
    %v1651 = vtanh.pop %v1650
    %v1653 = vrot.slane %v1651, 2
    %v1655 = vsub.f32 %v1584, %v1653
    %v1657 = vrot.slane %v1655, 6
    %1658 = vrot.lane.b32.xlu0 %v1657, 96
    %v1659 = vpop.permute.xlu0 %1658
    %v1661 = vmul.f32 %v1638, %v1659
    %1663 = vrot.lane.b32.xlu0 %v1661, 32
    %v1664 = vpop.permute.xlu0 %1663
    %v1666 = vadd.f32 %v1651, %v1664
    %1668 = vrot.lane.b32.xlu0 %v1666, 64
    %v1669 = vpop.permute.xlu0 %1668
    %1671 = vst.msk [vmem:[%s6 + $0x8] sm:$0x30] %vm1346, %v1669
    %v1672 = vadd.f32 %v1060, %v1348
    %v1673 = vrot.slane %v1666, 4
    %1674 = vrot.lane.b32.xlu0 %v1673, 64
    %v1675 = vpop.permute.xlu0 %1674
    %v1676 = vsel %vm62, %v1675, 0
    %1678 = vmatpush.msra.mxu0 0.0
    %1679 = vmatpush.msra.mxu0 0.0
    %1680 = vmatpush.msra.mxu0 0.0
    %1681 = vmatpush.msra.mxu0 0.0
    %1682 = vmatpush.msra.mxu0 0.0
    %1683 = vmatpush.msra.mxu0 0.0
    %1684 = vmatpush.msra.mxu0 0.0
    %1685 = vmatpush.msra.mxu0 0.0
    %1686 = vmatpush.msra.mxu0 0.0
    %1687 = vmatpush.msra.mxu0 0.0
    %1688 = vmatpush.msra.mxu0 0.0
    %1689 = vmatpush.msra.mxu0 0.0
    %1690 = vmatpush.msra.mxu0 %v50
    %1691 = vmatpush.msra.mxu0 %v49
    %1692 = vmatpush.msra.mxu0 %v48
    %1693 = vmatpush.msra.mxu0 %v47
    %1694 = vmatmul.f32.gmra.mxu0 %v1676
    %v1695 = vpop.f32.mrf.mxu0
    %v1696 = vadd.f32 0.0, %v1695
    %1697 = vdwg.mxu0
    %v1699 = vrot.slane %v1696, 2
    %v1701 = vadd.f32 %v1672, %v1699
    %v1702 = vxor.u32 %v1701, 2147483648
    %v1703 = vmul.f32 %v1702, 1.442695
    %v1704 = vpow.pop %v1703
    %v1705 = vadd.f32 %v1704, 1.0
    %v1706 = vrcp.pop %v1705
    %v1707 = vmul.f32 %v1705, %v1706
    %v1708 = vsub.f32 1.0, %v1707
    %v1709 = vmul.f32 %v1706, %v1708
    %v1710 = vadd.f32 %v1706, %v1709
    %vm1711 = vweird.f32 %v1705
    %vm1712 = vweird.f32 %v1706
    %vm1713 = vmor %vm1711, %vm1712
    %v1714 = vsel %vm1713, %v1706, %v1710
    %v1715 = vand.u32 2147483647, %v1705
    %vm1716 = vcmp.eq.f32.partialorder %v1715, 8.507059e+37
    %v1717 = vand.u32 %v1705, 2147483648
    %v1718 = vor.u32 1.1754944e-38, %v1717
    %v1719 = vsel %vm1716, %v1718, %v1714
    %v1720 = vmul.f32 1.0, %v1719
    %v1721 = vadd.f32 %v1696, %v1145
    %v1723 = vrot.slane %v1721, 2
    %1724 = vrot.lane.b32.xlu0 %v1723, 64
    %v1725 = vpop.permute.xlu0 %1724
    %v1727 = vmul.f32 %v1720, %v1725
    %1729 = vrot.lane.b32.xlu0 %v1727, 64
    %v1730 = vpop.permute.xlu0 %1729
    %v1732 = vadd.f32 %v1672, %v1730
    %v1733 = vtanh.pop %v1732
    %v1735 = vrot.slane %v1733, 2
    %v1737 = vsub.f32 %v1666, %v1735
    %v1739 = vrot.slane %v1737, 6
    %1740 = vrot.lane.b32.xlu0 %v1739, 96
    %v1741 = vpop.permute.xlu0 %1740
    %v1743 = vmul.f32 %v1720, %v1741
    %1745 = vrot.lane.b32.xlu0 %v1743, 32
    %v1746 = vpop.permute.xlu0 %1745
    %v1748 = vadd.f32 %v1733, %v1746
    %1750 = vrot.lane.b32.xlu0 %v1748, 64
    %v1751 = vpop.permute.xlu0 %1750
    %1753 = vst.msk [vmem:[%s6 + $0x8] sm:$0xc0] %vm1431, %v1751
    %v1754 = vld [vmem:[%s6] sm:$0xff]
    %v1755 = vld [vmem:[%s6 + $0x8] sm:$0xff]
    %v1756 = vld [vmem:[%s3 + $0x28] sm:$0xff]
    %v1757 = vld [vmem:[%s3 + $0x68] sm:$0xff]
    %v1758 = vld [vmem:[%s3 + $0xa8] sm:$0xff]
    %v1759 = vld [vmem:[%s3 + $0xe8] sm:$0xff]
    %v1760 = vld [vmem:[%s5 + $0x6] sm:$0x1]
    %v1761 = vperm.slane %v1760, 0
    %v1763 = vsel %vm62, %v1754, 0
    %v1766 = vsel %vm62, %v1755, 0
    %1768 = vmatpush.msra.mxu0 0.0
    %1769 = vmatpush.msra.mxu0 0.0
    %1770 = vmatpush.msra.mxu0 0.0
    %1771 = vmatpush.msra.mxu0 0.0
    %1772 = vmatpush.msra.mxu0 0.0
    %1773 = vmatpush.msra.mxu0 0.0
    %1774 = vmatpush.msra.mxu0 0.0
    %1775 = vmatpush.msra.mxu0 0.0
    %1776 = vmatpush.msra.mxu0 0.0
    %1777 = vmatpush.msra.mxu0 0.0
    %1778 = vmatpush.msra.mxu0 0.0
    %1779 = vmatpush.msra.mxu0 0.0
    %1780 = vmatpush.msra.mxu0 %v1759
    %1781 = vmatpush.msra.mxu0 %v1758
    %1782 = vmatpush.msra.mxu0 %v1757
    %1783 = vmatpush.msra.mxu0 %v1756
    %1784 = vmatmul.f32.gmra.mxu0 %v1763
    %v1785 = vpop.f32.mrf.mxu0
    %v1786 = vadd.f32 %v1761, %v1785
    %1787 = vmatmul.f32.gmra.mxu0 %v1766
    %v1788 = vpop.f32.mrf.mxu0
    %v1789 = vadd.f32 %v1761, %v1788
    %1790 = vdwg.mxu0
    %v1791 = vmax.f32 %v1786, 0.0
    %v1792 = vmax.f32 %v1789, 0.0
    %v1793 = vld [vmem:[%s3 + $0x30] sm:$0xff]
    %v1794 = vld [vmem:[%s3 + $0x70] sm:$0xff]
    %v1795 = vld [vmem:[%s3 + $0xb0] sm:$0xff]
    %v1796 = vld [vmem:[%s3 + $0xf0] sm:$0xff]
    %v1797 = vld [vmem:[%s5 + $0x7] sm:$0x1]
    %v1798 = vperm.slane %v1797, 0
    %v1800 = vsel %vm62, %v1791, 0
    %v1803 = vsel %vm62, %v1792, 0
    %1805 = vmatpush.msra.mxu0 0.0
    %1806 = vmatpush.msra.mxu0 0.0
    %1807 = vmatpush.msra.mxu0 0.0
    %1808 = vmatpush.msra.mxu0 0.0
    %1809 = vmatpush.msra.mxu0 0.0
    %1810 = vmatpush.msra.mxu0 0.0
    %1811 = vmatpush.msra.mxu0 0.0
    %1812 = vmatpush.msra.mxu0 0.0
    %1813 = vmatpush.msra.mxu0 0.0
    %1814 = vmatpush.msra.mxu0 0.0
    %1815 = vmatpush.msra.mxu0 0.0
    %1816 = vmatpush.msra.mxu0 0.0
    %1817 = vmatpush.msra.mxu0 %v1796
    %1818 = vmatpush.msra.mxu0 %v1795
    %1819 = vmatpush.msra.mxu0 %v1794
    %1820 = vmatpush.msra.mxu0 %v1793
    %1821 = vmatmul.f32.gmra.mxu0 %v1800
    %v1822 = vpop.f32.mrf.mxu0
    %v1823 = vadd.f32 %v1798, %v1822
    %1824 = vmatmul.f32.gmra.mxu0 %v1803
    %v1825 = vpop.f32.mrf.mxu0
    %v1826 = vadd.f32 %v1798, %v1825
    %1827 = vdwg.mxu0
    %v1828 = vmax.f32 %v1823, 0.0
    %v1829 = vmax.f32 %v1826, 0.0
    %v1830 = vld [vmem:[%s3 + $0x38] sm:$0xff]
    %v1831 = vld [vmem:[%s3 + $0x78] sm:$0xff]
    %v1832 = vld [vmem:[%s3 + $0xb8] sm:$0xff]
    %v1833 = vld [vmem:[%s3 + $0xf8] sm:$0xff]
    %v1834 = vld [vmem:[%s5 + $0x8] sm:$0x1]
    %v1835 = vperm.slane %v1834, 0
    %v1837 = vsel %vm62, %v1828, 0
    %v1840 = vsel %vm62, %v1829, 0
    %1842 = vmatpush.msra.mxu0 0.0
    %1843 = vmatpush.msra.mxu0 0.0
    %1844 = vmatpush.msra.mxu0 0.0
    %1845 = vmatpush.msra.mxu0 0.0
    %1846 = vmatpush.msra.mxu0 0.0
    %1847 = vmatpush.msra.mxu0 0.0
    %1848 = vmatpush.msra.mxu0 0.0
    %1849 = vmatpush.msra.mxu0 0.0
    %1850 = vmatpush.msra.mxu0 0.0
    %1851 = vmatpush.msra.mxu0 0.0
    %1852 = vmatpush.msra.mxu0 0.0
    %1853 = vmatpush.msra.mxu0 0.0
    %1854 = vmatpush.msra.mxu0 %v1833
    %1855 = vmatpush.msra.mxu0 %v1832
    %1856 = vmatpush.msra.mxu0 %v1831
    %1857 = vmatpush.msra.mxu0 %v1830
    %1858 = vmatmul.f32.gmra.mxu0 %v1837
    %v1859 = vpop.f32.mrf.mxu0
    %v1860 = vadd.f32 %v1835, %v1859
    %1861 = vmatmul.f32.gmra.mxu0 %v1840
    %v1862 = vpop.f32.mrf.mxu0
    %v1863 = vadd.f32 %v1835, %v1862
    %1864 = vdwg.mxu0
    %1867 = vrot.lane.b32.xlu0 %v1860, 32
    %v1868 = vpop.permute.xlu0 %1867
    %1869 = vrot.lane.b32.xlu0 %v1863, 32
    %v1870 = vpop.permute.xlu0 %1869
    %vm1873 = vcmask 335104
    %1874 = vst.msk [vmem:[%s6] sm:$0xff] %vm1873, %v1868
    %1875 = vst.msk [vmem:[%s6 + $0x8] sm:$0xff] %vm1873, %v1870
    // Predicated region
    $region30: #{recurrence_forward.1} parent=1 // pred_check
      _
    $region31: #{recurrence_forward.1} parent=1 // pred_check_branch
      %1877 = sbr.rel (0) target = $region33
    $region32: #{recurrence_forward.1} parent=1 // pred_region
      _
    $region33: #{recurrence_forward.1} parent=1 // pred_fallthru
      _
    // Predicated region
    $region34: #{recurrence_forward.1} parent=1 // pred_check
      _
    $region35: #{recurrence_forward.1} parent=1 // pred_check_branch
      %1879 = sbr.rel (0) target = $region37
    $region36: #{recurrence_forward.1} parent=1 // pred_region
      _
    $region37: #{recurrence_forward.1} parent=1 // pred_fallthru
      _
    %1880 = vsyncpa [#allocation3], 1

</llo_original>
